<compile_context>
chip_gen: v6e
topology: v6e:2x2x1
jax: 0.10.0
libtpu: 0.0.40
codegen_flags: <defaults>
</compile_context>

<pallas_src>
import math
import functools

import numpy as np
import jax
import jax.numpy as jnp
from jax.experimental import pallas as pl
from jax.experimental.pallas import tpu as pltpu

DEFAULT_ANCHORS = [[10, 13, 16, 30, 33, 23],
                   [30, 61, 62, 45, 59, 119],
                   [116, 90, 156, 198, 373, 326]]

C_PAD = 128          # lane-dense channel padding for every activation / weight output dim
MAX_TILE_M = 512     # 2 in-bufs + 2x2 out-bufs at 512x128 << 32 MiB scoped VMEM (v7x-safe)
VMEM_LIMIT = 32 * 1024 * 1024


def _round_up(x, m):
    return ((x + m - 1) // m) * m


# ----------------------------- Pallas kernels ------------------------------

def _conv1x1_kernel(x_ref, w_ref, b_ref, o_ref, *, apply_silu):
    """o = x @ w + b (bf16 MXU matmul, f32 accumulate), optional f32 SiLU, bf16 store."""
    acc = jnp.dot(x_ref[...], w_ref[...], preferred_element_type=jnp.float32)
    acc = acc + b_ref[...]                       # (1, 128) f32 bias, resident in VMEM
    if apply_silu:
        acc = acc * jax.nn.sigmoid(acc)          # elementwise math kept in f32 (v5e-safe)
    o_ref[...] = acc.astype(o_ref.dtype)


def _head_fused_kernel(x_ref, w_ref, b_ref, g_ref, meta_ref, raw_ref, dec_ref, *, stride):
    """Fused YOLO head: 1x1 conv + bias -> raw map, then sigmoid + xy/wh decode -> decoded map.

    Column metadata (meta_ref, shape (4, 128), constant per level):
      row 0: 1.0 where the column is an x-coordinate channel (c == 0)
      row 1: 1.0 where the column is a y-coordinate channel (c == 1)
      row 2: 1.0 where the column is a w/h channel          (c in {2, 3})
      row 3: anchor_grid value (anchor w or h) on w/h columns, 0 elsewhere
    g_ref (tile_m, 2) carries (x - 0.5, y - 0.5) pixel-grid coords per row.
    """
    p = jnp.dot(x_ref[...], w_ref[...], preferred_element_type=jnp.float32) + b_ref[...]
    raw_ref[...] = p                                             # lane-dense f32 store

    y = jax.nn.sigmoid(p)                                        # f32 VPU/EUP math
    sel_x = meta_ref[0:1, :]
    sel_y = meta_ref[1:2, :]
    wh_m = meta_ref[2:3, :]
    anch = meta_ref[3:4, :]
    gx = g_ref[:, 0:1]                                           # (tile_m, 1)
    gy = g_ref[:, 1:2]

    grid_v = sel_x * gx + sel_y * gy                             # (tile_m, 128)
    xy_m = sel_x + sel_y
    xy = (y * 2.0 + grid_v) * stride
    wh = (y * 2.0) ** 2 * anch
    dec_ref[...] = jnp.where(xy_m > 0.0, xy, jnp.where(wh_m > 0.0, wh, y))


# ------------------------------ conv wrapper --------------------------------

def conv1x1_silu(x_nhwc, w_bf16, b_f32, *, stride):
    """Strided 1x1 conv + SiLU as a tiled, pipelined Pallas matmul (bf16 in, bf16 out)."""
    # TODO(synk): fold the strided spatial subsample into the kernel DMA (strided row gather)
    # instead of an XLA slice; negligible at these stand-in shapes.
    x_s = x_nhwc[:, ::stride, ::stride, :] if stride > 1 else x_nhwc
    B, H, W, Cin = x_s.shape
    Kp, Cout = w_bf16.shape
    if Cin < Kp:                                   # zero-pad input channels (e.g. 3 -> 8)
        x_s = jnp.pad(x_s, ((0, 0), (0, 0), (0, 0), (0, Kp - Cin)))
    M = B * H * W
    tile_m = min(MAX_TILE_M, _round_up(M, 8))
    Mp = _round_up(M, tile_m)
    xf = x_s.reshape(M, Kp).astype(jnp.bfloat16)
    if Mp != M:
        xf = jnp.pad(xf, ((0, Mp - M), (0, 0)))

    out = pl.pallas_call(
        functools.partial(_conv1x1_kernel, apply_silu=True),
        out_shape=jax.ShapeDtypeStruct((Mp, Cout), jnp.bfloat16),
        grid_spec=pltpu.PrefetchScalarGridSpec(
            num_scalar_prefetch=0,
            grid=(Mp // tile_m,),
            in_specs=[pl.BlockSpec((tile_m, Kp), lambda m: (m, 0)),
                      pl.BlockSpec((Kp, Cout), lambda m: (0, 0)),     # fetched once
                      pl.BlockSpec((1, Cout), lambda m: (0, 0))],     # fetched once
            out_specs=pl.BlockSpec((tile_m, Cout), lambda m: (m, 0))),
        compiler_params=pltpu.CompilerParams(
            dimension_semantics=("parallel",),
            vmem_limit_bytes=VMEM_LIMIT),
    )(xf, w_bf16, b_f32)
    return out[:M].reshape(B, H, W, Cout)


# ------------------------------- YOLO head ---------------------------------

class YOLOHeadJAX:
    def __init__(self, nc, ch, key):
        anchors = np.array(DEFAULT_ANCHORS, dtype=np.float32)
        self.nc = nc
        self.no = nc + 5
        self.nl = anchors.shape[0]
        self.na = anchors.shape[1] // 2
        self.stride = np.array([8.0, 16.0, 32.0], dtype=np.float32)
        self.cout_pad = _round_up(self.na * self.no, 128)

        anchors = anchors.reshape(self.nl, -1, 2)
        # YOLOHead.__init__: anchors /= stride
        anchors = anchors / self.stride.reshape(-1, 1, 1)
        # check_anchor_order
        prod = anchors.prod(-1).mean(-1).reshape(-1)
        da = prod[-1] - prod[0]
        ds = self.stride[-1] - self.stride[0]
        if da != 0 and np.sign(da) != np.sign(ds):
            anchors = anchors[::-1].copy()
        # FlexibleYOLO.__init__: stride recomputed from forward (== 8/16/32 here),
        # then anchors /= stride a second time (faithful to the reference code).
        anchors = anchors / self.stride.reshape(-1, 1, 1)
        self.anchors = anchors

        nano = self.na * self.no
        self.w, self.b, self.meta = [], [], []
        for i, c in enumerate(ch):
            key, k1 = jax.random.split(key)
            w_real = jax.random.normal(k1, (c, nano), jnp.float32) / math.sqrt(c)
            w_pad = jnp.zeros((C_PAD, self.cout_pad), jnp.float32).at[:c, :nano].set(w_real)
            self.w.append(w_pad.astype(jnp.bfloat16))

            # YOLO bias priors (deterministic), placed in the first na*no padded columns.
            b_real = np.zeros((self.na, self.no), np.float32)
            s = self.stride[i]
            b_real[:, 4] += math.log(8 / (640 / s) ** 2)                 # obj prior
            b_real[:, 5:] += math.log(0.6 / (self.nc - 0.999999))        # cls prior
            b_pad = np.zeros((1, self.cout_pad), np.float32)
            b_pad[0, :nano] = b_real.reshape(-1)
            self.b.append(jnp.asarray(b_pad))

            # Per-column decode metadata (built once, batch-size independent).
            anchor_px = self.anchors[i] * self.stride[i]                 # (na, 2)
            meta = np.zeros((4, self.cout_pad), np.float32)
            for a_idx in range(self.na):
                base = a_idx * self.no
                meta[0, base + 0] = 1.0
                meta[1, base + 1] = 1.0
                meta[2, base + 2] = 1.0
                meta[2, base + 3] = 1.0
                meta[3, base + 2] = anchor_px[a_idx, 0]
                meta[3, base + 3] = anchor_px[a_idx, 1]
            self.meta.append(jnp.asarray(meta))

    def __call__(self, feats):
        xs, zs = [], []
        nano = self.na * self.no
        for i, f in enumerate(feats):
            B, ny, nx, C = f.shape
            M = B * ny * nx
            tile_m = min(MAX_TILE_M, _round_up(M, 8))
            Mp = _round_up(M, tile_m)
            xf = f.reshape(M, C).astype(jnp.bfloat16)
            if Mp != M:
                xf = jnp.pad(xf, ((0, Mp - M), (0, 0)))

            # Compact per-row pixel-grid coords (x-0.5, y-0.5); shape-static under jit.
            rows = jnp.arange(Mp, dtype=jnp.int32)
            gx = (rows % nx).astype(jnp.float32) - 0.5
            gy = ((rows // nx) % ny).astype(jnp.float32) - 0.5
            gxy = jnp.stack([gx, gy], axis=1)                            # (Mp, 2) f32

            raw, dec = pl.pallas_call(
                functools.partial(_head_fused_kernel, stride=float(self.stride[i])),
                out_shape=(jax.ShapeDtypeStruct((Mp, self.cout_pad), jnp.float32),
                           jax.ShapeDtypeStruct((Mp, self.cout_pad), jnp.float32)),
                grid_spec=pltpu.PrefetchScalarGridSpec(
                    num_scalar_prefetch=0,
                    grid=(Mp // tile_m,),
                    in_specs=[pl.BlockSpec((tile_m, C), lambda m: (m, 0)),
                              pl.BlockSpec((C, self.cout_pad), lambda m: (0, 0)),
                              pl.BlockSpec((1, self.cout_pad), lambda m: (0, 0)),
                              pl.BlockSpec((tile_m, 2), lambda m: (m, 0)),
                              pl.BlockSpec((4, self.cout_pad), lambda m: (0, 0))],
                    out_specs=(pl.BlockSpec((tile_m, self.cout_pad), lambda m: (m, 0)),
                               pl.BlockSpec((tile_m, self.cout_pad), lambda m: (m, 0)))),
                compiler_params=pltpu.CompilerParams(
                    dimension_semantics=("parallel",),
                    vmem_limit_bytes=VMEM_LIMIT),
            )(xf, self.w[i], self.b[i], gxy, self.meta[i])

            # Presentation-only reshapes/transposes (off the kernel critical path):
            # torch: (bs, na*no, ny, nx).view(bs,na,no,ny,nx).permute(0,1,3,4,2)
            raw = raw[:M, :nano].reshape(B, ny, nx, self.na, self.no)
            xs.append(jnp.transpose(raw, (0, 3, 1, 2, 4)))
            dec = dec[:M, :nano].reshape(B, ny, nx, self.na, self.no)
            zs.append(jnp.transpose(dec, (0, 3, 1, 2, 4)).reshape(B, self.na * ny * nx, self.no))
        # eval mode, export=False -> (cat(z, 1), x)
        return jnp.concatenate(zs, axis=1), xs


# ------------------------------ FlexibleYOLO -------------------------------

class FlexibleYOLOJAX:
    def __init__(self, nc=4, key=None):
        key = jax.random.PRNGKey(0) if key is None else key
        # TODO(synk): backbone/neck are built from an external YAML config via
        # build_backbone/build_neck (not provided); synthesized here as a strided
        # 1x1-conv + SiLU pyramid producing feature maps at strides 8/16/32.
        ch = (16, 32, 64)          # real channel counts (stored zero-padded to C_PAD lanes)
        cins = (3, ch[0], ch[1])
        kin_pads = (_round_up(3, 8), C_PAD, C_PAD)
        strides = (8, 2, 2)
        key, k1, k2, k3 = jax.random.split(key, 4)
        self.bb = []
        for k, cin, kin_pad, cout, s in zip((k1, k2, k3), cins, kin_pads, ch, strides):
            w_real = jax.random.normal(k, (cin, cout), jnp.float32) / math.sqrt(cin)
            w_pad = jnp.zeros((kin_pad, C_PAD), jnp.float32).at[:cin, :cout].set(w_real)
            b_pad = jnp.zeros((1, C_PAD), jnp.float32)
            self.bb.append((w_pad.astype(jnp.bfloat16), b_pad, s))
        self.detection = YOLOHeadJAX(nc, ch, key)

    def __call__(self, x_nchw):
        x = jnp.transpose(x_nchw, (0, 2, 3, 1))        # NCHW -> NHWC
        feats, cur = [], x
        for w, b, s in self.bb:
            cur = conv1x1_silu(cur, w, b, stride=s)    # bf16, 128-lane padded features
            feats.append(cur)
        return self.detection(feats)


# ---------------------------------- main ------------------------------------

if __name__ == "__main__":
    key = jax.random.PRNGKey(0)
    k_in, k_par = jax.random.split(key)
    x = jax.random.normal(k_in, (2, 3, 64, 64), jnp.float32)   # NCHW like PyTorch

    model = FlexibleYOLOJAX(nc=4, key=k_par)
    fwd = jax.jit(model.__call__)
    z, xs = fwd(x)

    jax.block_until_ready(z)
    for xi in xs:
        jax.block_until_ready(xi)

    # sanity: z is (bs, na*(8*8+4*4+2*2), no) = (2, 252, 9); xs[i] is (2, 3, ny, nx, 9)
    assert z.shape == (2, 3 * (64 + 16 + 4), 9), z.shape
    assert xs[0].shape == (2, 3, 8, 8, 9)
    assert xs[1].shape == (2, 3, 4, 4, 9)
    assert xs[2].shape == (2, 3, 2, 2, 9)
    assert bool(jnp.all(jnp.isfinite(z)))
    for xi in xs:
        assert bool(jnp.all(jnp.isfinite(xi)))

    print("KERNEL_OK")
</pallas_src>

<mosaic_0001>
module attributes {stable_mosaic.version = 11 : i64} {
  func.func @_conv1x1_kernel(%arg0: i32, %arg1: memref<128x8xbf16, #tpu.memory_space<vmem>>, %arg2: memref<8x128xbf16, #tpu.memory_space<vmem>>, %arg3: memref<1x128xf32, #tpu.memory_space<vmem>>, %arg4: memref<128x128xbf16, #tpu.memory_space<vmem>>) attributes {dimension_semantics = [#tpu.dimension_semantics<parallel>], iteration_bounds = array<i64: 1>, scalar_prefetch = 0 : i64, scratch_operands = 0 : i64, tpu.core_type = #tpu.core_type<tc>, window_params = [{transform_indices = @transform_0, window_bounds = array<i64: 128, 8>}, {pipeline_mode = #tpu.pipeline_mode<synchronous>, transform_indices = @transform_1, window_bounds = array<i64: 8, 128>}, {pipeline_mode = #tpu.pipeline_mode<synchronous>, transform_indices = @transform_2, window_bounds = array<i64: 1, 128>}, {transform_indices = @transform_3, window_bounds = array<i64: 128, 128>}]} {
    %c0 = arith.constant 0 : index
    %c0_0 = arith.constant 0 : index
    %0 = vector.load %arg1[%c0, %c0_0] : memref<128x8xbf16, #tpu.memory_space<vmem>>, vector<128x8xbf16>
    %c0_1 = arith.constant 0 : index
    %c0_2 = arith.constant 0 : index
    %1 = vector.load %arg2[%c0_1, %c0_2] : memref<8x128xbf16, #tpu.memory_space<vmem>>, vector<8x128xbf16>
    %cst = arith.constant dense<0.000000e+00> : vector<128x128xf32>
    %2 = tpu.matmul %0, %1, %cst {dimension_numbers = #tpu.dot_dimension_numbers<[1], [0], [0], [1], [0, 0, 1, 1], [], []>} : vector<128x8xbf16>, vector<8x128xbf16>, vector<128x128xf32> -> vector<128x128xf32>
    %c0_3 = arith.constant 0 : index
    %c0_4 = arith.constant 0 : index
    %3 = vector.load %arg3[%c0_3, %c0_4] : memref<1x128xf32, #tpu.memory_space<vmem>>, vector<1x128xf32>
    %4 = vector.broadcast %3 : vector<1x128xf32> to vector<128x128xf32>
    %5 = arith.addf %2, %4 : vector<128x128xf32>
    %6 = arith.negf %5 : vector<128x128xf32>
    %7 = math.exp %6 : vector<128x128xf32>
    %cst_5 = arith.constant 1.000000e+00 : f32
    %8 = vector.broadcast %cst_5 : f32 to vector<128x128xf32>
    %9 = arith.addf %8, %7 : vector<128x128xf32>
    %10 = arith.divf %8, %9 : vector<128x128xf32>
    %11 = arith.mulf %5, %10 : vector<128x128xf32>
    %12 = arith.truncf %11 : vector<128x128xf32> to vector<128x128xbf16>
    %c0_6 = arith.constant 0 : index
    %c0_7 = arith.constant 0 : index
    %13 = vector.load %arg4[%c0_6, %c0_7] : memref<128x128xbf16, #tpu.memory_space<vmem>>, vector<128x128xbf16>
    tpu.vector_store %arg4[%c0_6, %c0_7], %12 {strides = array<i32>} : memref<128x128xbf16, #tpu.memory_space<vmem>>, vector<128x128xbf16>,
    return
  }
  func.func @transform_0(%arg0: i32) -> (i32, i32) {
    %c0_i32 = arith.constant 0 : i32
    %c0_i32_0 = arith.constant 0 : i32
    return %arg0, %c0_i32 : i32, i32
  }
  func.func @transform_1(%arg0: i32) -> (i32, i32) {
    %c0_i32 = arith.constant 0 : i32
    %c0_i32_0 = arith.constant 0 : i32
    %c0_i32_1 = arith.constant 0 : i32
    return %c0_i32, %c0_i32_0 : i32, i32
  }
  func.func @transform_2(%arg0: i32) -> (i32, i32) {
    %c0_i32 = arith.constant 0 : i32
    %c0_i32_0 = arith.constant 0 : i32
    %c0_i32_1 = arith.constant 0 : i32
    return %c0_i32, %c0_i32_0 : i32, i32
  }
  func.func @transform_3(%arg0: i32) -> (i32, i32) {
    %c0_i32 = arith.constant 0 : i32
    %c0_i32_0 = arith.constant 0 : i32
    return %arg0, %c0_i32 : i32, i32
  }
}

module attributes {stable_mosaic.version = 11 : i64} {
  func.func @_conv1x1_kernel(%arg0: i32, %arg1: memref<8x128xbf16, #tpu.memory_space<vmem>>, %arg2: memref<128x128xbf16, #tpu.memory_space<vmem>>, %arg3: memref<1x128xf32, #tpu.memory_space<vmem>>, %arg4: memref<8x128xbf16, #tpu.memory_space<vmem>>) attributes {dimension_semantics = [#tpu.dimension_semantics<parallel>], iteration_bounds = array<i64: 1>, scalar_prefetch = 0 : i64, scratch_operands = 0 : i64, tpu.core_type = #tpu.core_type<tc>, window_params = [{transform_indices = @transform_0, window_bounds = array<i64: 8, 128>}, {pipeline_mode = #tpu.pipeline_mode<synchronous>, transform_indices = @transform_1, window_bounds = array<i64: 128, 128>}, {pipeline_mode = #tpu.pipeline_mode<synchronous>, transform_indices = @transform_2, window_bounds = array<i64: 1, 128>}, {transform_indices = @transform_3, window_bounds = array<i64: 8, 128>}]} {
    %c0 = arith.constant 0 : index
    %c0_0 = arith.constant 0 : index
    %0 = vector.load %arg1[%c0, %c0_0] : memref<8x128xbf16, #tpu.memory_space<vmem>>, vector<8x128xbf16>
    %c0_1 = arith.constant 0 : index
    %c0_2 = arith.constant 0 : index
    %1 = vector.load %arg2[%c0_1, %c0_2] : memref<128x128xbf16, #tpu.memory_space<vmem>>, vector<128x128xbf16>
    %cst = arith.constant dense<0.000000e+00> : vector<8x128xf32>
    %2 = tpu.matmul %0, %1, %cst {dimension_numbers = #tpu.dot_dimension_numbers<[1], [0], [0], [1], [0, 0, 1, 1], [], []>} : vector<8x128xbf16>, vector<128x128xbf16>, vector<8x128xf32> -> vector<8x128xf32>
    %c0_3 = arith.constant 0 : index
    %c0_4 = arith.constant 0 : index
    %3 = vector.load %arg3[%c0_3, %c0_4] : memref<1x128xf32, #tpu.memory_space<vmem>>, vector<1x128xf32>
    %4 = vector.broadcast %3 : vector<1x128xf32> to vector<8x128xf32>
    %5 = arith.addf %2, %4 : vector<8x128xf32>
    %6 = arith.negf %5 : vector<8x128xf32>
    %7 = math.exp %6 : vector<8x128xf32>
    %cst_5 = arith.constant 1.000000e+00 : f32
    %8 = vector.broadcast %cst_5 : f32 to vector<8x128xf32>
    %9 = arith.addf %8, %7 : vector<8x128xf32>
    %10 = arith.divf %8, %9 : vector<8x128xf32>
    %11 = arith.mulf %5, %10 : vector<8x128xf32>
    %12 = arith.truncf %11 : vector<8x128xf32> to vector<8x128xbf16>
    %c0_6 = arith.constant 0 : index
    %c0_7 = arith.constant 0 : index
    %13 = vector.load %arg4[%c0_6, %c0_7] : memref<8x128xbf16, #tpu.memory_space<vmem>>, vector<8x128xbf16>
    tpu.vector_store %arg4[%c0_6, %c0_7], %12 {strides = array<i32>} : memref<8x128xbf16, #tpu.memory_space<vmem>>, vector<8x128xbf16>,
    return
  }
  func.func @transform_0(%arg0: i32) -> (i32, i32) {
    %c0_i32 = arith.constant 0 : i32
    %c0_i32_0 = arith.constant 0 : i32
    return %arg0, %c0_i32 : i32, i32
  }
  func.func @transform_1(%arg0: i32) -> (i32, i32) {
    %c0_i32 = arith.constant 0 : i32
    %c0_i32_0 = arith.constant 0 : i32
    %c0_i32_1 = arith.constant 0 : i32
    return %c0_i32, %c0_i32_0 : i32, i32
  }
  func.func @transform_2(%arg0: i32) -> (i32, i32) {
    %c0_i32 = arith.constant 0 : i32
    %c0_i32_0 = arith.constant 0 : i32
    %c0_i32_1 = arith.constant 0 : i32
    return %c0_i32, %c0_i32_0 : i32, i32
  }
  func.func @transform_3(%arg0: i32) -> (i32, i32) {
    %c0_i32 = arith.constant 0 : i32
    %c0_i32_0 = arith.constant 0 : i32
    return %arg0, %c0_i32 : i32, i32
  }
}

module attributes {stable_mosaic.version = 11 : i64} {
  func.func @_conv1x1_kernel(%arg0: i32, %arg1: memref<32x128xbf16, #tpu.memory_space<vmem>>, %arg2: memref<128x128xbf16, #tpu.memory_space<vmem>>, %arg3: memref<1x128xf32, #tpu.memory_space<vmem>>, %arg4: memref<32x128xbf16, #tpu.memory_space<vmem>>) attributes {dimension_semantics = [#tpu.dimension_semantics<parallel>], iteration_bounds = array<i64: 1>, scalar_prefetch = 0 : i64, scratch_operands = 0 : i64, tpu.core_type = #tpu.core_type<tc>, window_params = [{transform_indices = @transform_0, window_bounds = array<i64: 32, 128>}, {pipeline_mode = #tpu.pipeline_mode<synchronous>, transform_indices = @transform_1, window_bounds = array<i64: 128, 128>}, {pipeline_mode = #tpu.pipeline_mode<synchronous>, transform_indices = @transform_2, window_bounds = array<i64: 1, 128>}, {transform_indices = @transform_3, window_bounds = array<i64: 32, 128>}]} {
    %c0 = arith.constant 0 : index
    %c0_0 = arith.constant 0 : index
    %0 = vector.load %arg1[%c0, %c0_0] : memref<32x128xbf16, #tpu.memory_space<vmem>>, vector<32x128xbf16>
    %c0_1 = arith.constant 0 : index
    %c0_2 = arith.constant 0 : index
    %1 = vector.load %arg2[%c0_1, %c0_2] : memref<128x128xbf16, #tpu.memory_space<vmem>>, vector<128x128xbf16>
    %cst = arith.constant dense<0.000000e+00> : vector<32x128xf32>
    %2 = tpu.matmul %0, %1, %cst {dimension_numbers = #tpu.dot_dimension_numbers<[1], [0], [0], [1], [0, 0, 1, 1], [], []>} : vector<32x128xbf16>, vector<128x128xbf16>, vector<32x128xf32> -> vector<32x128xf32>
    %c0_3 = arith.constant 0 : index
    %c0_4 = arith.constant 0 : index
    %3 = vector.load %arg3[%c0_3, %c0_4] : memref<1x128xf32, #tpu.memory_space<vmem>>, vector<1x128xf32>
    %4 = vector.broadcast %3 : vector<1x128xf32> to vector<32x128xf32>
    %5 = arith.addf %2, %4 : vector<32x128xf32>
    %6 = arith.negf %5 : vector<32x128xf32>
    %7 = math.exp %6 : vector<32x128xf32>
    %cst_5 = arith.constant 1.000000e+00 : f32
    %8 = vector.broadcast %cst_5 : f32 to vector<32x128xf32>
    %9 = arith.addf %8, %7 : vector<32x128xf32>
    %10 = arith.divf %8, %9 : vector<32x128xf32>
    %11 = arith.mulf %5, %10 : vector<32x128xf32>
    %12 = arith.truncf %11 : vector<32x128xf32> to vector<32x128xbf16>
    %c0_6 = arith.constant 0 : index
    %c0_7 = arith.constant 0 : index
    %13 = vector.load %arg4[%c0_6, %c0_7] : memref<32x128xbf16, #tpu.memory_space<vmem>>, vector<32x128xbf16>
    tpu.vector_store %arg4[%c0_6, %c0_7], %12 {strides = array<i32>} : memref<32x128xbf16, #tpu.memory_space<vmem>>, vector<32x128xbf16>,
    return
  }
  func.func @transform_0(%arg0: i32) -> (i32, i32) {
    %c0_i32 = arith.constant 0 : i32
    %c0_i32_0 = arith.constant 0 : i32
    return %arg0, %c0_i32 : i32, i32
  }
  func.func @transform_1(%arg0: i32) -> (i32, i32) {
    %c0_i32 = arith.constant 0 : i32
    %c0_i32_0 = arith.constant 0 : i32
    %c0_i32_1 = arith.constant 0 : i32
    return %c0_i32, %c0_i32_0 : i32, i32
  }
  func.func @transform_2(%arg0: i32) -> (i32, i32) {
    %c0_i32 = arith.constant 0 : i32
    %c0_i32_0 = arith.constant 0 : i32
    %c0_i32_1 = arith.constant 0 : i32
    return %c0_i32, %c0_i32_0 : i32, i32
  }
  func.func @transform_3(%arg0: i32) -> (i32, i32) {
    %c0_i32 = arith.constant 0 : i32
    %c0_i32_0 = arith.constant 0 : i32
    return %arg0, %c0_i32 : i32, i32
  }
}

module attributes {stable_mosaic.version = 11 : i64} {
  func.func @_head_fused_kernel(%arg0: i32, %arg1: memref<8x128xbf16, #tpu.memory_space<vmem>>, %arg2: memref<128x128xbf16, #tpu.memory_space<vmem>>, %arg3: memref<1x128xf32, #tpu.memory_space<vmem>>, %arg4: memref<8x2xf32, #tpu.memory_space<vmem>>, %arg5: memref<4x128xf32, #tpu.memory_space<vmem>>, %arg6: memref<8x128xf32, #tpu.memory_space<vmem>>, %arg7: memref<8x128xf32, #tpu.memory_space<vmem>>) attributes {dimension_semantics = [#tpu.dimension_semantics<parallel>], iteration_bounds = array<i64: 1>, scalar_prefetch = 0 : i64, scratch_operands = 0 : i64, tpu.core_type = #tpu.core_type<tc>, window_params = [{transform_indices = @transform_0, window_bounds = array<i64: 8, 128>}, {pipeline_mode = #tpu.pipeline_mode<synchronous>, transform_indices = @transform_1, window_bounds = array<i64: 128, 128>}, {pipeline_mode = #tpu.pipeline_mode<synchronous>, transform_indices = @transform_2, window_bounds = array<i64: 1, 128>}, {transform_indices = @transform_3, window_bounds = array<i64: 8, 2>}, {pipeline_mode = #tpu.pipeline_mode<synchronous>, transform_indices = @transform_4, window_bounds = array<i64: 4, 128>}, {transform_indices = @transform_5, window_bounds = array<i64: 8, 128>}, {transform_indices = @transform_6, window_bounds = array<i64: 8, 128>}]} {
    %c0 = arith.constant 0 : index
    %c0_0 = arith.constant 0 : index
    %0 = vector.load %arg1[%c0, %c0_0] : memref<8x128xbf16, #tpu.memory_space<vmem>>, vector<8x128xbf16>
    %c0_1 = arith.constant 0 : index
    %c0_2 = arith.constant 0 : index
    %1 = vector.load %arg2[%c0_1, %c0_2] : memref<128x128xbf16, #tpu.memory_space<vmem>>, vector<128x128xbf16>
    %cst = arith.constant dense<0.000000e+00> : vector<8x128xf32>
    %2 = tpu.matmul %0, %1, %cst {dimension_numbers = #tpu.dot_dimension_numbers<[1], [0], [0], [1], [0, 0, 1, 1], [], []>} : vector<8x128xbf16>, vector<128x128xbf16>, vector<8x128xf32> -> vector<8x128xf32>
    %c0_3 = arith.constant 0 : index
    %c0_4 = arith.constant 0 : index
    %3 = vector.load %arg3[%c0_3, %c0_4] : memref<1x128xf32, #tpu.memory_space<vmem>>, vector<1x128xf32>
    %4 = vector.broadcast %3 : vector<1x128xf32> to vector<8x128xf32>
    %5 = arith.addf %2, %4 : vector<8x128xf32>
    %c0_5 = arith.constant 0 : index
    %c0_6 = arith.constant 0 : index
    %6 = vector.load %arg6[%c0_5, %c0_6] : memref<8x128xf32, #tpu.memory_space<vmem>>, vector<8x128xf32>
    tpu.vector_store %arg6[%c0_5, %c0_6], %5 {strides = array<i32>} : memref<8x128xf32, #tpu.memory_space<vmem>>, vector<8x128xf32>,
    %7 = arith.negf %5 : vector<8x128xf32>
    %8 = math.exp %7 : vector<8x128xf32>
    %cst_7 = arith.constant 1.000000e+00 : f32
    %9 = vector.broadcast %cst_7 : f32 to vector<8x128xf32>
    %10 = arith.addf %9, %8 : vector<8x128xf32>
    %11 = arith.divf %9, %10 : vector<8x128xf32>
    %c0_8 = arith.constant 0 : index
    %c0_9 = arith.constant 0 : index
    %12 = vector.load %arg5[%c0_8, %c0_9] : memref<4x128xf32, #tpu.memory_space<vmem>>, vector<1x128xf32>
    %c1 = arith.constant 1 : index
    %c0_10 = arith.constant 0 : index
    %13 = vector.load %arg5[%c1, %c0_10] : memref<4x128xf32, #tpu.memory_space<vmem>>, vector<1x128xf32>
    %c2 = arith.constant 2 : index
    %c0_11 = arith.constant 0 : index
    %14 = vector.load %arg5[%c2, %c0_11] : memref<4x128xf32, #tpu.memory_space<vmem>>, vector<1x128xf32>
    %c3 = arith.constant 3 : index
    %c0_12 = arith.constant 0 : index
    %15 = vector.load %arg5[%c3, %c0_12] : memref<4x128xf32, #tpu.memory_space<vmem>>, vector<1x128xf32>
    %c0_13 = arith.constant 0 : index
    %c0_14 = arith.constant 0 : index
    %16 = vector.load %arg4[%c0_13, %c0_14] : memref<8x2xf32, #tpu.memory_space<vmem>>, vector<8x1xf32>
    %c0_15 = arith.constant 0 : index
    %c1_16 = arith.constant 1 : index
    %17 = vector.load %arg4[%c0_15, %c1_16] : memref<8x2xf32, #tpu.memory_space<vmem>>, vector<8x1xf32>
    %18 = vector.broadcast %12 : vector<1x128xf32> to vector<8x128xf32>
    %19 = vector.broadcast %16 : vector<8x1xf32> to vector<8x128xf32>
    %20 = arith.mulf %18, %19 : vector<8x128xf32>
    %21 = vector.broadcast %13 : vector<1x128xf32> to vector<8x128xf32>
    %22 = vector.broadcast %17 : vector<8x1xf32> to vector<8x128xf32>
    %23 = arith.mulf %21, %22 : vector<8x128xf32>
    %24 = arith.addf %20, %23 : vector<8x128xf32>
    %25 = arith.addf %12, %13 : vector<1x128xf32>
    %cst_17 = arith.constant 2.000000e+00 : f32
    %26 = vector.broadcast %cst_17 : f32 to vector<8x128xf32>
    %27 = arith.mulf %11, %26 : vector<8x128xf32>
    %28 = arith.addf %27, %24 : vector<8x128xf32>
    %cst_18 = arith.constant 3.200000e+01 : f32
    %29 = vector.broadcast %cst_18 : f32 to vector<8x128xf32>
    %30 = arith.mulf %28, %29 : vector<8x128xf32>
    %cst_19 = arith.constant 2.000000e+00 : f32
    %31 = vector.broadcast %cst_19 : f32 to vector<8x128xf32>
    %32 = arith.mulf %11, %31 : vector<8x128xf32>
    %33 = arith.mulf %32, %32 : vector<8x128xf32>
    %34 = vector.broadcast %15 : vector<1x128xf32> to vector<8x128xf32>
    %35 = arith.mulf %33, %34 : vector<8x128xf32>
    %cst_20 = arith.constant 0.000000e+00 : f32
    %36 = vector.broadcast %cst_20 : f32 to vector<1x128xf32>
    %37 = arith.cmpf ogt, %25, %36 : vector<1x128xf32>
    %cst_21 = arith.constant 0.000000e+00 : f32
    %38 = vector.broadcast %cst_21 : f32 to vector<1x128xf32>
    %39 = arith.cmpf ogt, %14, %38 : vector<1x128xf32>
    %40 = vector.shape_cast %39 : vector<1x128xi1> to vector<1x128xi1>
    %41 = vector.broadcast %40 : vector<1x128xi1> to vector<8x128xi1>
    %42 = arith.select %41, %35, %11 : vector<8x128xi1>, vector<8x128xf32>
    %43 = vector.shape_cast %37 : vector<1x128xi1> to vector<1x128xi1>
    %44 = vector.broadcast %43 : vector<1x128xi1> to vector<8x128xi1>
    %45 = arith.select %44, %30, %42 : vector<8x128xi1>, vector<8x128xf32>
    %c0_22 = arith.constant 0 : index
    %c0_23 = arith.constant 0 : index
    %46 = vector.load %arg7[%c0_22, %c0_23] : memref<8x128xf32, #tpu.memory_space<vmem>>, vector<8x128xf32>
    tpu.vector_store %arg7[%c0_22, %c0_23], %45 {strides = array<i32>} : memref<8x128xf32, #tpu.memory_space<vmem>>, vector<8x128xf32>,
    return
  }
  func.func @transform_0(%arg0: i32) -> (i32, i32) {
    %c0_i32 = arith.constant 0 : i32
    %c0_i32_0 = arith.constant 0 : i32
    return %arg0, %c0_i32 : i32, i32
  }
  func.func @transform_1(%arg0: i32) -> (i32, i32) {
    %c0_i32 = arith.constant 0 : i32
    %c0_i32_0 = arith.constant 0 : i32
    %c0_i32_1 = arith.constant 0 : i32
    return %c0_i32, %c0_i32_0 : i32, i32
  }
  func.func @transform_2(%arg0: i32) -> (i32, i32) {
    %c0_i32 = arith.constant 0 : i32
    %c0_i32_0 = arith.constant 0 : i32
    %c0_i32_1 = arith.constant 0 : i32
    return %c0_i32, %c0_i32_0 : i32, i32
  }
  func.func @transform_3(%arg0: i32) -> (i32, i32) {
    %c0_i32 = arith.constant 0 : i32
    %c0_i32_0 = arith.constant 0 : i32
    return %arg0, %c0_i32 : i32, i32
  }
  func.func @transform_4(%arg0: i32) -> (i32, i32) {
    %c0_i32 = arith.constant 0 : i32
    %c0_i32_0 = arith.constant 0 : i32
    %c0_i32_1 = arith.constant 0 : i32
    return %c0_i32, %c0_i32_0 : i32, i32
  }
  func.func @transform_5(%arg0: i32) -> (i32, i32) {
    %c0_i32 = arith.constant 0 : i32
    %c0_i32_0 = arith.constant 0 : i32
    return %arg0, %c0_i32 : i32, i32
  }
  func.func @transform_6(%arg0: i32) -> (i32, i32) {
    %c0_i32 = arith.constant 0 : i32
    %c0_i32_0 = arith.constant 0 : i32
    return %arg0, %c0_i32 : i32, i32
  }
}

module attributes {stable_mosaic.version = 11 : i64} {
  func.func @_head_fused_kernel(%arg0: i32, %arg1: memref<32x128xbf16, #tpu.memory_space<vmem>>, %arg2: memref<128x128xbf16, #tpu.memory_space<vmem>>, %arg3: memref<1x128xf32, #tpu.memory_space<vmem>>, %arg4: memref<32x2xf32, #tpu.memory_space<vmem>>, %arg5: memref<4x128xf32, #tpu.memory_space<vmem>>, %arg6: memref<32x128xf32, #tpu.memory_space<vmem>>, %arg7: memref<32x128xf32, #tpu.memory_space<vmem>>) attributes {dimension_semantics = [#tpu.dimension_semantics<parallel>], iteration_bounds = array<i64: 1>, scalar_prefetch = 0 : i64, scratch_operands = 0 : i64, tpu.core_type = #tpu.core_type<tc>, window_params = [{transform_indices = @transform_0, window_bounds = array<i64: 32, 128>}, {pipeline_mode = #tpu.pipeline_mode<synchronous>, transform_indices = @transform_1, window_bounds = array<i64: 128, 128>}, {pipeline_mode = #tpu.pipeline_mode<synchronous>, transform_indices = @transform_2, window_bounds = array<i64: 1, 128>}, {transform_indices = @transform_3, window_bounds = array<i64: 32, 2>}, {pipeline_mode = #tpu.pipeline_mode<synchronous>, transform_indices = @transform_4, window_bounds = array<i64: 4, 128>}, {transform_indices = @transform_5, window_bounds = array<i64: 32, 128>}, {transform_indices = @transform_6, window_bounds = array<i64: 32, 128>}]} {
    %c0 = arith.constant 0 : index
    %c0_0 = arith.constant 0 : index
    %0 = vector.load %arg1[%c0, %c0_0] : memref<32x128xbf16, #tpu.memory_space<vmem>>, vector<32x128xbf16>
    %c0_1 = arith.constant 0 : index
    %c0_2 = arith.constant 0 : index
    %1 = vector.load %arg2[%c0_1, %c0_2] : memref<128x128xbf16, #tpu.memory_space<vmem>>, vector<128x128xbf16>
    %cst = arith.constant dense<0.000000e+00> : vector<32x128xf32>
    %2 = tpu.matmul %0, %1, %cst {dimension_numbers = #tpu.dot_dimension_numbers<[1], [0], [0], [1], [0, 0, 1, 1], [], []>} : vector<32x128xbf16>, vector<128x128xbf16>, vector<32x128xf32> -> vector<32x128xf32>
    %c0_3 = arith.constant 0 : index
    %c0_4 = arith.constant 0 : index
    %3 = vector.load %arg3[%c0_3, %c0_4] : memref<1x128xf32, #tpu.memory_space<vmem>>, vector<1x128xf32>
    %4 = vector.broadcast %3 : vector<1x128xf32> to vector<32x128xf32>
    %5 = arith.addf %2, %4 : vector<32x128xf32>
    %c0_5 = arith.constant 0 : index
    %c0_6 = arith.constant 0 : index
    %6 = vector.load %arg6[%c0_5, %c0_6] : memref<32x128xf32, #tpu.memory_space<vmem>>, vector<32x128xf32>
    tpu.vector_store %arg6[%c0_5, %c0_6], %5 {strides = array<i32>} : memref<32x128xf32, #tpu.memory_space<vmem>>, vector<32x128xf32>,
    %7 = arith.negf %5 : vector<32x128xf32>
    %8 = math.exp %7 : vector<32x128xf32>
    %cst_7 = arith.constant 1.000000e+00 : f32
    %9 = vector.broadcast %cst_7 : f32 to vector<32x128xf32>
    %10 = arith.addf %9, %8 : vector<32x128xf32>
    %11 = arith.divf %9, %10 : vector<32x128xf32>
    %c0_8 = arith.constant 0 : index
    %c0_9 = arith.constant 0 : index
    %12 = vector.load %arg5[%c0_8, %c0_9] : memref<4x128xf32, #tpu.memory_space<vmem>>, vector<1x128xf32>
    %c1 = arith.constant 1 : index
    %c0_10 = arith.constant 0 : index
    %13 = vector.load %arg5[%c1, %c0_10] : memref<4x128xf32, #tpu.memory_space<vmem>>, vector<1x128xf32>
    %c2 = arith.constant 2 : index
    %c0_11 = arith.constant 0 : index
    %14 = vector.load %arg5[%c2, %c0_11] : memref<4x128xf32, #tpu.memory_space<vmem>>, vector<1x128xf32>
    %c3 = arith.constant 3 : index
    %c0_12 = arith.constant 0 : index
    %15 = vector.load %arg5[%c3, %c0_12] : memref<4x128xf32, #tpu.memory_space<vmem>>, vector<1x128xf32>
    %c0_13 = arith.constant 0 : index
    %c0_14 = arith.constant 0 : index
    %16 = vector.load %arg4[%c0_13, %c0_14] : memref<32x2xf32, #tpu.memory_space<vmem>>, vector<32x1xf32>
    %c0_15 = arith.constant 0 : index
    %c1_16 = arith.constant 1 : index
    %17 = vector.load %arg4[%c0_15, %c1_16] : memref<32x2xf32, #tpu.memory_space<vmem>>, vector<32x1xf32>
    %18 = vector.broadcast %12 : vector<1x128xf32> to vector<32x128xf32>
    %19 = vector.broadcast %16 : vector<32x1xf32> to vector<32x128xf32>
    %20 = arith.mulf %18, %19 : vector<32x128xf32>
    %21 = vector.broadcast %13 : vector<1x128xf32> to vector<32x128xf32>
    %22 = vector.broadcast %17 : vector<32x1xf32> to vector<32x128xf32>
    %23 = arith.mulf %21, %22 : vector<32x128xf32>
    %24 = arith.addf %20, %23 : vector<32x128xf32>
    %25 = arith.addf %12, %13 : vector<1x128xf32>
    %cst_17 = arith.constant 2.000000e+00 : f32
    %26 = vector.broadcast %cst_17 : f32 to vector<32x128xf32>
    %27 = arith.mulf %11, %26 : vector<32x128xf32>
    %28 = arith.addf %27, %24 : vector<32x128xf32>
    %cst_18 = arith.constant 1.600000e+01 : f32
    %29 = vector.broadcast %cst_18 : f32 to vector<32x128xf32>
    %30 = arith.mulf %28, %29 : vector<32x128xf32>
    %cst_19 = arith.constant 2.000000e+00 : f32
    %31 = vector.broadcast %cst_19 : f32 to vector<32x128xf32>
    %32 = arith.mulf %11, %31 : vector<32x128xf32>
    %33 = arith.mulf %32, %32 : vector<32x128xf32>
    %34 = vector.broadcast %15 : vector<1x128xf32> to vector<32x128xf32>
    %35 = arith.mulf %33, %34 : vector<32x128xf32>
    %cst_20 = arith.constant 0.000000e+00 : f32
    %36 = vector.broadcast %cst_20 : f32 to vector<1x128xf32>
    %37 = arith.cmpf ogt, %25, %36 : vector<1x128xf32>
    %cst_21 = arith.constant 0.000000e+00 : f32
    %38 = vector.broadcast %cst_21 : f32 to vector<1x128xf32>
    %39 = arith.cmpf ogt, %14, %38 : vector<1x128xf32>
    %40 = vector.shape_cast %39 : vector<1x128xi1> to vector<1x128xi1>
    %41 = vector.broadcast %40 : vector<1x128xi1> to vector<32x128xi1>
    %42 = arith.select %41, %35, %11 : vector<32x128xi1>, vector<32x128xf32>
    %43 = vector.shape_cast %37 : vector<1x128xi1> to vector<1x128xi1>
    %44 = vector.broadcast %43 : vector<1x128xi1> to vector<32x128xi1>
    %45 = arith.select %44, %30, %42 : vector<32x128xi1>, vector<32x128xf32>
    %c0_22 = arith.constant 0 : index
    %c0_23 = arith.constant 0 : index
    %46 = vector.load %arg7[%c0_22, %c0_23] : memref<32x128xf32, #tpu.memory_space<vmem>>, vector<32x128xf32>
    tpu.vector_store %arg7[%c0_22, %c0_23], %45 {strides = array<i32>} : memref<32x128xf32, #tpu.memory_space<vmem>>, vector<32x128xf32>,
    return
  }
  func.func @transform_0(%arg0: i32) -> (i32, i32) {
    %c0_i32 = arith.constant 0 : i32
    %c0_i32_0 = arith.constant 0 : i32
    return %arg0, %c0_i32 : i32, i32
  }
  func.func @transform_1(%arg0: i32) -> (i32, i32) {
    %c0_i32 = arith.constant 0 : i32
    %c0_i32_0 = arith.constant 0 : i32
    %c0_i32_1 = arith.constant 0 : i32
    return %c0_i32, %c0_i32_0 : i32, i32
  }
  func.func @transform_2(%arg0: i32) -> (i32, i32) {
    %c0_i32 = arith.constant 0 : i32
    %c0_i32_0 = arith.constant 0 : i32
    %c0_i32_1 = arith.constant 0 : i32
    return %c0_i32, %c0_i32_0 : i32, i32
  }
  func.func @transform_3(%arg0: i32) -> (i32, i32) {
    %c0_i32 = arith.constant 0 : i32
    %c0_i32_0 = arith.constant 0 : i32
    return %arg0, %c0_i32 : i32, i32
  }
  func.func @transform_4(%arg0: i32) -> (i32, i32) {
    %c0_i32 = arith.constant 0 : i32
    %c0_i32_0 = arith.constant 0 : i32
    %c0_i32_1 = arith.constant 0 : i32
    return %c0_i32, %c0_i32_0 : i32, i32
  }
  func.func @transform_5(%arg0: i32) -> (i32, i32) {
    %c0_i32 = arith.constant 0 : i32
    %c0_i32_0 = arith.constant 0 : i32
    return %arg0, %c0_i32 : i32, i32
  }
  func.func @transform_6(%arg0: i32) -> (i32, i32) {
    %c0_i32 = arith.constant 0 : i32
    %c0_i32_0 = arith.constant 0 : i32
    return %arg0, %c0_i32 : i32, i32
  }
}

module attributes {stable_mosaic.version = 11 : i64} {
  func.func @_head_fused_kernel(%arg0: i32, %arg1: memref<128x128xbf16, #tpu.memory_space<vmem>>, %arg2: memref<128x128xbf16, #tpu.memory_space<vmem>>, %arg3: memref<1x128xf32, #tpu.memory_space<vmem>>, %arg4: memref<128x2xf32, #tpu.memory_space<vmem>>, %arg5: memref<4x128xf32, #tpu.memory_space<vmem>>, %arg6: memref<128x128xf32, #tpu.memory_space<vmem>>, %arg7: memref<128x128xf32, #tpu.memory_space<vmem>>) attributes {dimension_semantics = [#tpu.dimension_semantics<parallel>], iteration_bounds = array<i64: 1>, scalar_prefetch = 0 : i64, scratch_operands = 0 : i64, tpu.core_type = #tpu.core_type<tc>, window_params = [{transform_indices = @transform_0, window_bounds = array<i64: 128, 128>}, {pipeline_mode = #tpu.pipeline_mode<synchronous>, transform_indices = @transform_1, window_bounds = array<i64: 128, 128>}, {pipeline_mode = #tpu.pipeline_mode<synchronous>, transform_indices = @transform_2, window_bounds = array<i64: 1, 128>}, {transform_indices = @transform_3, window_bounds = array<i64: 128, 2>}, {pipeline_mode = #tpu.pipeline_mode<synchronous>, transform_indices = @transform_4, window_bounds = array<i64: 4, 128>}, {transform_indices = @transform_5, window_bounds = array<i64: 128, 128>}, {transform_indices = @transform_6, window_bounds = array<i64: 128, 128>}]} {
    %c0 = arith.constant 0 : index
    %c0_0 = arith.constant 0 : index
    %0 = vector.load %arg1[%c0, %c0_0] : memref<128x128xbf16, #tpu.memory_space<vmem>>, vector<128x128xbf16>
    %c0_1 = arith.constant 0 : index
    %c0_2 = arith.constant 0 : index
    %1 = vector.load %arg2[%c0_1, %c0_2] : memref<128x128xbf16, #tpu.memory_space<vmem>>, vector<128x128xbf16>
    %cst = arith.constant dense<0.000000e+00> : vector<128x128xf32>
    %2 = tpu.matmul %0, %1, %cst {dimension_numbers = #tpu.dot_dimension_numbers<[1], [0], [0], [1], [0, 0, 1, 1], [], []>} : vector<128x128xbf16>, vector<128x128xbf16>, vector<128x128xf32> -> vector<128x128xf32>
    %c0_3 = arith.constant 0 : index
    %c0_4 = arith.constant 0 : index
    %3 = vector.load %arg3[%c0_3, %c0_4] : memref<1x128xf32, #tpu.memory_space<vmem>>, vector<1x128xf32>
    %4 = vector.broadcast %3 : vector<1x128xf32> to vector<128x128xf32>
    %5 = arith.addf %2, %4 : vector<128x128xf32>
    %c0_5 = arith.constant 0 : index
    %c0_6 = arith.constant 0 : index
    %6 = vector.load %arg6[%c0_5, %c0_6] : memref<128x128xf32, #tpu.memory_space<vmem>>, vector<128x128xf32>
    tpu.vector_store %arg6[%c0_5, %c0_6], %5 {strides = array<i32>} : memref<128x128xf32, #tpu.memory_space<vmem>>, vector<128x128xf32>,
    %7 = arith.negf %5 : vector<128x128xf32>
    %8 = math.exp %7 : vector<128x128xf32>
    %cst_7 = arith.constant 1.000000e+00 : f32
    %9 = vector.broadcast %cst_7 : f32 to vector<128x128xf32>
    %10 = arith.addf %9, %8 : vector<128x128xf32>
    %11 = arith.divf %9, %10 : vector<128x128xf32>
    %c0_8 = arith.constant 0 : index
    %c0_9 = arith.constant 0 : index
    %12 = vector.load %arg5[%c0_8, %c0_9] : memref<4x128xf32, #tpu.memory_space<vmem>>, vector<1x128xf32>
    %c1 = arith.constant 1 : index
    %c0_10 = arith.constant 0 : index
    %13 = vector.load %arg5[%c1, %c0_10] : memref<4x128xf32, #tpu.memory_space<vmem>>, vector<1x128xf32>
    %c2 = arith.constant 2 : index
    %c0_11 = arith.constant 0 : index
    %14 = vector.load %arg5[%c2, %c0_11] : memref<4x128xf32, #tpu.memory_space<vmem>>, vector<1x128xf32>
    %c3 = arith.constant 3 : index
    %c0_12 = arith.constant 0 : index
    %15 = vector.load %arg5[%c3, %c0_12] : memref<4x128xf32, #tpu.memory_space<vmem>>, vector<1x128xf32>
    %c0_13 = arith.constant 0 : index
    %c0_14 = arith.constant 0 : index
    %16 = vector.load %arg4[%c0_13, %c0_14] : memref<128x2xf32, #tpu.memory_space<vmem>>, vector<128x1xf32>
    %c0_15 = arith.constant 0 : index
    %c1_16 = arith.constant 1 : index
    %17 = vector.load %arg4[%c0_15, %c1_16] : memref<128x2xf32, #tpu.memory_space<vmem>>, vector<128x1xf32>
    %18 = vector.broadcast %12 : vector<1x128xf32> to vector<128x128xf32>
    %19 = vector.broadcast %16 : vector<128x1xf32> to vector<128x128xf32>
    %20 = arith.mulf %18, %19 : vector<128x128xf32>
    %21 = vector.broadcast %13 : vector<1x128xf32> to vector<128x128xf32>
    %22 = vector.broadcast %17 : vector<128x1xf32> to vector<128x128xf32>
    %23 = arith.mulf %21, %22 : vector<128x128xf32>
    %24 = arith.addf %20, %23 : vector<128x128xf32>
    %25 = arith.addf %12, %13 : vector<1x128xf32>
    %cst_17 = arith.constant 2.000000e+00 : f32
    %26 = vector.broadcast %cst_17 : f32 to vector<128x128xf32>
    %27 = arith.mulf %11, %26 : vector<128x128xf32>
    %28 = arith.addf %27, %24 : vector<128x128xf32>
    %cst_18 = arith.constant 8.000000e+00 : f32
    %29 = vector.broadcast %cst_18 : f32 to vector<128x128xf32>
    %30 = arith.mulf %28, %29 : vector<128x128xf32>
    %cst_19 = arith.constant 2.000000e+00 : f32
    %31 = vector.broadcast %cst_19 : f32 to vector<128x128xf32>
    %32 = arith.mulf %11, %31 : vector<128x128xf32>
    %33 = arith.mulf %32, %32 : vector<128x128xf32>
    %34 = vector.broadcast %15 : vector<1x128xf32> to vector<128x128xf32>
    %35 = arith.mulf %33, %34 : vector<128x128xf32>
    %cst_20 = arith.constant 0.000000e+00 : f32
    %36 = vector.broadcast %cst_20 : f32 to vector<1x128xf32>
    %37 = arith.cmpf ogt, %25, %36 : vector<1x128xf32>
    %cst_21 = arith.constant 0.000000e+00 : f32
    %38 = vector.broadcast %cst_21 : f32 to vector<1x128xf32>
    %39 = arith.cmpf ogt, %14, %38 : vector<1x128xf32>
    %40 = vector.shape_cast %39 : vector<1x128xi1> to vector<1x128xi1>
    %41 = vector.broadcast %40 : vector<1x128xi1> to vector<128x128xi1>
    %42 = arith.select %41, %35, %11 : vector<128x128xi1>, vector<128x128xf32>
    %43 = vector.shape_cast %37 : vector<1x128xi1> to vector<1x128xi1>
    %44 = vector.broadcast %43 : vector<1x128xi1> to vector<128x128xi1>
    %45 = arith.select %44, %30, %42 : vector<128x128xi1>, vector<128x128xf32>
    %c0_22 = arith.constant 0 : index
    %c0_23 = arith.constant 0 : index
    %46 = vector.load %arg7[%c0_22, %c0_23] : memref<128x128xf32, #tpu.memory_space<vmem>>, vector<128x128xf32>
    tpu.vector_store %arg7[%c0_22, %c0_23], %45 {strides = array<i32>} : memref<128x128xf32, #tpu.memory_space<vmem>>, vector<128x128xf32>,
    return
  }
  func.func @transform_0(%arg0: i32) -> (i32, i32) {
    %c0_i32 = arith.constant 0 : i32
    %c0_i32_0 = arith.constant 0 : i32
    return %arg0, %c0_i32 : i32, i32
  }
  func.func @transform_1(%arg0: i32) -> (i32, i32) {
    %c0_i32 = arith.constant 0 : i32
    %c0_i32_0 = arith.constant 0 : i32
    %c0_i32_1 = arith.constant 0 : i32
    return %c0_i32, %c0_i32_0 : i32, i32
  }
  func.func @transform_2(%arg0: i32) -> (i32, i32) {
    %c0_i32 = arith.constant 0 : i32
    %c0_i32_0 = arith.constant 0 : i32
    %c0_i32_1 = arith.constant 0 : i32
    return %c0_i32, %c0_i32_0 : i32, i32
  }
  func.func @transform_3(%arg0: i32) -> (i32, i32) {
    %c0_i32 = arith.constant 0 : i32
    %c0_i32_0 = arith.constant 0 : i32
    return %arg0, %c0_i32 : i32, i32
  }
  func.func @transform_4(%arg0: i32) -> (i32, i32) {
    %c0_i32 = arith.constant 0 : i32
    %c0_i32_0 = arith.constant 0 : i32
    %c0_i32_1 = arith.constant 0 : i32
    return %c0_i32, %c0_i32_0 : i32, i32
  }
  func.func @transform_5(%arg0: i32) -> (i32, i32) {
    %c0_i32 = arith.constant 0 : i32
    %c0_i32_0 = arith.constant 0 : i32
    return %arg0, %c0_i32 : i32, i32
  }
  func.func @transform_6(%arg0: i32) -> (i32, i32) {
    %c0_i32 = arith.constant 0 : i32
    %c0_i32_0 = arith.constant 0 : i32
    return %arg0, %c0_i32 : i32, i32
  }
}

</mosaic_0001>

<llo_original>
// kernel: a_call__.8
$region0: #{a_call__.8}
  #allocation0 [shape = 'u32[]', space=smem, size = 0x4, offset = 0x4, fixed_abs, tag = 'smem constant byte address 0x4 - core index']
  #allocation1 [shape = 'u32[144,128]{1,0:T(1,128)}', space=vmem, size = 0x12000, scoped, tag = 'internal scratch']
  %s0 = inlined_call_operand.vmem [shape: bf16[8,128], index: 0, kind: input, shape index: {}]
  %s1 = inlined_call_operand.vmem [shape: bf16[128,128], index: 1, kind: input, shape index: {}]
  %s2 = inlined_call_operand.vmem [shape: f32[1,128], index: 2, kind: input, shape index: {}]
  %s3 = inlined_call_operand.vmem [shape: bf16[8,128], index: 3, kind: output, shape index: {}]
  %s4 = sld [smem:[#allocation0]]
  $region22: #{a_call__.8} parent=0
    _
  %s6 = ssub.s32 1, %s4
  %s7 = scalar_select 0, %s6, %s4
  // Predicated region
  $region2: #{a_call__.8} parent=0 // pred_check
    _
  $region3: #{a_call__.8} parent=0 // pred_check_branch
    %9 = sbr.rel (0) target = $region5
  $region4: #{a_call__.8} parent=0 // pred_region
    _
  $region5: #{a_call__.8} parent=0 // pred_fallthru
    _
  // Predicated region
  $region6: #{a_call__.8} parent=0 // pred_check
    _
  $region7: #{a_call__.8} parent=0 // pred_check_branch
    %11 = sbr.rel (0) target = $region9
  $region8: #{a_call__.8} parent=0 // pred_region
    _
  $region9: #{a_call__.8} parent=0 // pred_fallthru
    _
  // Predicated region
  $region10: #{a_call__.8} parent=0 // pred_check
    _
  $region11: #{a_call__.8} parent=0 // pred_check_branch
    %13 = sbr.rel (0) target = $region13
  $region12: #{a_call__.8} parent=0 // pred_region
    _
  $region13: #{a_call__.8} parent=0 // pred_fallthru
    _
  %v15 = vld [vmem:[%s0] sm:$0xf]
  %v16 = vld [vmem:[%s1] sm:$0xf]
  %v17 = vld [vmem:[%s1 + $0x4] sm:$0xf]
  %v18 = vld [vmem:[%s1 + $0x8] sm:$0xf]
  %v19 = vld [vmem:[%s1 + $0xc] sm:$0xf]
  %v20 = vld [vmem:[%s1 + $0x10] sm:$0xf]
  %v21 = vld [vmem:[%s1 + $0x14] sm:$0xf]
  %v22 = vld [vmem:[%s1 + $0x18] sm:$0xf]
  %v23 = vld [vmem:[%s1 + $0x1c] sm:$0xf]
  %v24 = vld [vmem:[%s1 + $0x20] sm:$0xf]
  %v25 = vld [vmem:[%s1 + $0x24] sm:$0xf]
  %v26 = vld [vmem:[%s1 + $0x28] sm:$0xf]
  %v27 = vld [vmem:[%s1 + $0x2c] sm:$0xf]
  %v28 = vld [vmem:[%s1 + $0x30] sm:$0xf]
  %v29 = vld [vmem:[%s1 + $0x34] sm:$0xf]
  %v30 = vld [vmem:[%s1 + $0x38] sm:$0xf]
  %v31 = vld [vmem:[%s1 + $0x3c] sm:$0xf]
  %v32 = vld [vmem:[%s2] sm:$0x1]
  %v34 = vlaneseq
  %v35 = vshrl.u32 %v34, 7
  %v36 = vsub.s32 0, %v35
  %v37 = vrot.slane %v32, %v36
  %v55 = vunpack.c.l.b16 %v16
  %v56 = vunpack.c.l.b16 %v17
  %v57 = vunpack.c.l.b16 %v18
  %v58 = vunpack.c.l.b16 %v19
  %v59 = vunpack.c.l.b16 %v20
  %v60 = vunpack.c.l.b16 %v21
  %v61 = vunpack.c.l.b16 %v22
  %v62 = vunpack.c.l.b16 %v23
  %v63 = vunpack.c.l.b16 %v24
  %v64 = vunpack.c.l.b16 %v25
  %v65 = vunpack.c.l.b16 %v26
  %v66 = vunpack.c.l.b16 %v27
  %v67 = vunpack.c.l.b16 %v28
  %v68 = vunpack.c.l.b16 %v29
  %v69 = vunpack.c.l.b16 %v30
  %v70 = vunpack.c.l.b16 %v31
  %v71 = vpack.c.b16 %v56, %v55
  %v72 = vpack.c.b16 %v58, %v57
  %v73 = vpack.c.b16 %v60, %v59
  %v74 = vpack.c.b16 %v62, %v61
  %v75 = vpack.c.b16 %v64, %v63
  %v76 = vpack.c.b16 %v66, %v65
  %v77 = vpack.c.b16 %v68, %v67
  %v78 = vpack.c.b16 %v70, %v69
  %87 = vmatprep.subr.bf16.mxu0 0
  %88 = vmatpush1.bf16.msra.mxu0 %v78
  %89 = vmatprep.subr.bf16.mxu0 0
  %90 = vmatpush1.bf16.msra.mxu0 %v77
  %91 = vmatprep.subr.bf16.mxu0 0
  %92 = vmatpush1.bf16.msra.mxu0 %v76
  %93 = vmatprep.subr.bf16.mxu0 0
  %94 = vmatpush1.bf16.msra.mxu0 %v75
  %95 = vmatprep.subr.bf16.mxu0 0
  %96 = vmatpush1.bf16.msra.mxu0 %v74
  %97 = vmatprep.subr.bf16.mxu0 0
  %98 = vmatpush1.bf16.msra.mxu0 %v73
  %99 = vmatprep.subr.bf16.mxu0 0
  %100 = vmatpush1.bf16.msra.mxu0 %v72
  %101 = vmatprep.subr.bf16.mxu0 0
  %102 = vmatpush1.bf16.msra.mxu0 %v71
  %103 = vmatprep.subr.bf16.mxu0 0
  %104 = vmatpush2.bf16.msra.mxu0 0
  %105 = vmatprep.subr.bf16.mxu0 0
  %106 = vmatpush2.bf16.msra.mxu0 0
  %107 = vmatprep.subr.bf16.mxu0 0
  %108 = vmatpush2.bf16.msra.mxu0 0
  %109 = vmatprep.subr.bf16.mxu0 0
  %110 = vmatpush2.bf16.msra.mxu0 0
  %111 = vmatprep.subr.bf16.mxu0 0
  %112 = vmatpush2.bf16.msra.mxu0 0
  %113 = vmatprep.subr.bf16.mxu0 0
  %114 = vmatpush2.bf16.msra.mxu0 0
  %115 = vmatprep.subr.bf16.mxu0 0
  %116 = vmatpush2.bf16.msra.mxu0 0
  %117 = vmatprep.subr.bf16.mxu0 0
  %118 = vmatpush2.bf16.msra.mxu0 0
  %119 = vmatprep.mubr.bf16.mxu0 0
  %120 = vmatmul.mubr.bf16.gmra.mxu0 %v15
  %v121 = vpop.f32.mrf.mxu0
  %v122 = vadd.f32 %v37, %v121
  %v123 = vpop.f32.mrf.mxu0
  %v124 = vpop.f32.mrf.mxu0
  %v125 = vpop.f32.mrf.mxu0
  %126 = vdwg.mxu0
  %v127 = vxor.u32 %v122, 2147483648
  %v128 = vmul.f32 %v127, 1.442695
  %v129 = vpow.pop %v128
  %v130 = vadd.f32 %v129, 1.0
  %v131 = vrcp.pop %v130
  %v132 = vmul.f32 1.0, %v131
  %v133 = vmul.f32 %v122, %v132
  %v134 = vpack.c.bf16 %v133, %v133
  %135 = vst [vmem:[%s3] sm:$0xf] %v134
  // Predicated region
  $region14: #{a_call__.8} parent=0 // pred_check
    _
  $region15: #{a_call__.8} parent=0 // pred_check_branch
    %137 = sbr.rel (0) target = $region17
  $region16: #{a_call__.8} parent=0 // pred_region
    _
  $region17: #{a_call__.8} parent=0 // pred_fallthru
    _
  // Predicated region
  $region18: #{a_call__.8} parent=0 // pred_check
    _
  $region19: #{a_call__.8} parent=0 // pred_check_branch
    %139 = sbr.rel (0) target = $region21
  $region20: #{a_call__.8} parent=0 // pred_region
    _
  $region21: #{a_call__.8} parent=0 // pred_fallthru
    _

// kernel: a_call__.6
$region0: #{a_call__.6}
  #allocation0 [shape = 'u32[]', space=smem, size = 0x4, offset = 0x4, fixed_abs, tag = 'smem constant byte address 0x4 - core index']
  #allocation1 [shape = 'u32[144,128]{1,0:T(1,128)}', space=vmem, size = 0x12000, scoped, tag = 'internal scratch']
  %s0 = inlined_call_operand.vmem [shape: bf16[128,8], index: 0, kind: input, shape index: {}]
  %s1 = inlined_call_operand.vmem [shape: bf16[8,128], index: 1, kind: input, shape index: {}]
  %s2 = inlined_call_operand.vmem [shape: f32[1,128], index: 2, kind: input, shape index: {}]
  %s3 = inlined_call_operand.vmem [shape: bf16[128,128], index: 3, kind: output, shape index: {}]
  %s4 = sld [smem:[#allocation0]]
  $region22: #{a_call__.6} parent=0
    _
  %s6 = ssub.s32 1, %s4
  %s7 = scalar_select 0, %s6, %s4
  // Predicated region
  $region2: #{a_call__.6} parent=0 // pred_check
    _
  $region3: #{a_call__.6} parent=0 // pred_check_branch
    %9 = sbr.rel (0) target = $region5
  $region4: #{a_call__.6} parent=0 // pred_region
    _
  $region5: #{a_call__.6} parent=0 // pred_fallthru
    _
  // Predicated region
  $region6: #{a_call__.6} parent=0 // pred_check
    _
  $region7: #{a_call__.6} parent=0 // pred_check_branch
    %11 = sbr.rel (0) target = $region9
  $region8: #{a_call__.6} parent=0 // pred_region
    _
  $region9: #{a_call__.6} parent=0 // pred_fallthru
    _
  // Predicated region
  $region10: #{a_call__.6} parent=0 // pred_check
    _
  $region11: #{a_call__.6} parent=0 // pred_check_branch
    %13 = sbr.rel (0) target = $region13
  $region12: #{a_call__.6} parent=0 // pred_region
    _
  $region13: #{a_call__.6} parent=0 // pred_fallthru
    _
  %v15 = vld [vmem:[%s0] sm:$0xf]
  %v16 = vld [vmem:[%s0 + $0x4] sm:$0xf]
  %v17 = vld [vmem:[%s0 + $0x8] sm:$0xf]
  %v18 = vld [vmem:[%s0 + $0xc] sm:$0xf]
  %v19 = vld [vmem:[%s0 + $0x10] sm:$0xf]
  %v20 = vld [vmem:[%s0 + $0x14] sm:$0xf]
  %v21 = vld [vmem:[%s0 + $0x18] sm:$0xf]
  %v22 = vld [vmem:[%s0 + $0x1c] sm:$0xf]
  %v23 = vld [vmem:[%s0 + $0x20] sm:$0xf]
  %v24 = vld [vmem:[%s0 + $0x24] sm:$0xf]
  %v25 = vld [vmem:[%s0 + $0x28] sm:$0xf]
  %v26 = vld [vmem:[%s0 + $0x2c] sm:$0xf]
  %v27 = vld [vmem:[%s0 + $0x30] sm:$0xf]
  %v28 = vld [vmem:[%s0 + $0x34] sm:$0xf]
  %v29 = vld [vmem:[%s0 + $0x38] sm:$0xf]
  %v30 = vld [vmem:[%s0 + $0x3c] sm:$0xf]
  %v31 = vld [vmem:[%s1] sm:$0xf]
  %v32 = vld [vmem:[%s2] sm:$0x1]
  %v34 = vlaneseq
  %v35 = vshrl.u32 %v34, 7
  %v36 = vsub.s32 0, %v35
  %v37 = vrot.slane %v32, %v36
  %v55 = vunpack.c.l.b16 %v15
  %v56 = vunpack.c.l.b16 %v16
  %v57 = vunpack.c.l.b16 %v17
  %v58 = vunpack.c.l.b16 %v18
  %v59 = vunpack.c.l.b16 %v19
  %v60 = vunpack.c.l.b16 %v20
  %v61 = vunpack.c.l.b16 %v21
  %v62 = vunpack.c.l.b16 %v22
  %v63 = vunpack.c.l.b16 %v23
  %v64 = vunpack.c.l.b16 %v24
  %v65 = vunpack.c.l.b16 %v25
  %v66 = vunpack.c.l.b16 %v26
  %v67 = vunpack.c.l.b16 %v27
  %v68 = vunpack.c.l.b16 %v28
  %v69 = vunpack.c.l.b16 %v29
  %v70 = vunpack.c.l.b16 %v30
  %v71 = vpack.c.b16 %v56, %v55
  %v72 = vpack.c.b16 %v58, %v57
  %v73 = vpack.c.b16 %v60, %v59
  %v74 = vpack.c.b16 %v62, %v61
  %v75 = vpack.c.b16 %v64, %v63
  %v76 = vpack.c.b16 %v66, %v65
  %v77 = vpack.c.b16 %v68, %v67
  %v78 = vpack.c.b16 %v70, %v69
  %vm79 = vcmask 64512
  %v81 = vsel %vm79, %v71, 0
  %v84 = vsel %vm79, %v72, 0
  %v87 = vsel %vm79, %v73, 0
  %v90 = vsel %vm79, %v74, 0
  %v93 = vsel %vm79, %v75, 0
  %v96 = vsel %vm79, %v76, 0
  %v99 = vsel %vm79, %v77, 0
  %v102 = vsel %vm79, %v78, 0
  %vm104 = vcmask 1043456
  %v106 = vsel %vm104, %v31, 0
  %108 = vmatprep.subr.bf16.mxu0 0
  %109 = vmatpush1.bf16.msra.mxu0 0
  %110 = vmatprep.subr.bf16.mxu0 0
  %111 = vmatpush1.bf16.msra.mxu0 0
  %112 = vmatprep.subr.bf16.mxu0 0
  %113 = vmatpush1.bf16.msra.mxu0 0
  %114 = vmatprep.subr.bf16.mxu0 0
  %115 = vmatpush1.bf16.msra.mxu0 0
  %116 = vmatprep.subr.bf16.mxu0 0
  %117 = vmatpush1.bf16.msra.mxu0 0
  %118 = vmatprep.subr.bf16.mxu0 0
  %119 = vmatpush1.bf16.msra.mxu0 0
  %120 = vmatprep.subr.bf16.mxu0 0
  %121 = vmatpush1.bf16.msra.mxu0 0
  %122 = vmatprep.subr.bf16.mxu0 0
  %123 = vmatpush1.bf16.msra.mxu0 %v106
  %124 = vmatprep.subr.bf16.mxu0 0
  %125 = vmatpush2.bf16.msra.mxu0 0
  %126 = vmatprep.subr.bf16.mxu0 0
  %127 = vmatpush2.bf16.msra.mxu0 0
  %128 = vmatprep.subr.bf16.mxu0 0
  %129 = vmatpush2.bf16.msra.mxu0 0
  %130 = vmatprep.subr.bf16.mxu0 0
  %131 = vmatpush2.bf16.msra.mxu0 0
  %132 = vmatprep.subr.bf16.mxu0 0
  %133 = vmatpush2.bf16.msra.mxu0 0
  %134 = vmatprep.subr.bf16.mxu0 0
  %135 = vmatpush2.bf16.msra.mxu0 0
  %136 = vmatprep.subr.bf16.mxu0 0
  %137 = vmatpush2.bf16.msra.mxu0 0
  %138 = vmatprep.subr.bf16.mxu0 0
  %139 = vmatpush2.bf16.msra.mxu0 0
  %140 = vmatprep.mubr.bf16.mxu0 0
  %141 = vmatmul.mubr.bf16.gmra.mxu0 %v81
  %v142 = vpop.f32.mrf.mxu0
  %v143 = vadd.f32 %v37, %v142
  %v144 = vpop.f32.mrf.mxu0
  %v145 = vpop.f32.mrf.mxu0
  %v146 = vadd.f32 %v37, %v145
  %v147 = vpop.f32.mrf.mxu0
  %148 = vmatprep.mubr.bf16.mxu0 0
  %149 = vmatmul.mubr.bf16.gmra.mxu0 %v84
  %v150 = vpop.f32.mrf.mxu0
  %v151 = vadd.f32 %v37, %v150
  %v152 = vpop.f32.mrf.mxu0
  %v153 = vpop.f32.mrf.mxu0
  %v154 = vadd.f32 %v37, %v153
  %v155 = vpop.f32.mrf.mxu0
  %156 = vmatprep.mubr.bf16.mxu0 0
  %157 = vmatmul.mubr.bf16.gmra.mxu0 %v87
  %v158 = vpop.f32.mrf.mxu0
  %v159 = vadd.f32 %v37, %v158
  %v160 = vpop.f32.mrf.mxu0
  %v161 = vpop.f32.mrf.mxu0
  %v162 = vadd.f32 %v37, %v161
  %v163 = vpop.f32.mrf.mxu0
  %164 = vmatprep.mubr.bf16.mxu0 0
  %165 = vmatmul.mubr.bf16.gmra.mxu0 %v90
  %v166 = vpop.f32.mrf.mxu0
  %v167 = vadd.f32 %v37, %v166
  %v168 = vpop.f32.mrf.mxu0
  %v169 = vpop.f32.mrf.mxu0
  %v170 = vadd.f32 %v37, %v169
  %v171 = vpop.f32.mrf.mxu0
  %172 = vmatprep.mubr.bf16.mxu0 0
  %173 = vmatmul.mubr.bf16.gmra.mxu0 %v93
  %v174 = vpop.f32.mrf.mxu0
  %v175 = vadd.f32 %v37, %v174
  %v176 = vpop.f32.mrf.mxu0
  %v177 = vpop.f32.mrf.mxu0
  %v178 = vadd.f32 %v37, %v177
  %v179 = vpop.f32.mrf.mxu0
  %180 = vmatprep.mubr.bf16.mxu0 0
  %181 = vmatmul.mubr.bf16.gmra.mxu0 %v96
  %v182 = vpop.f32.mrf.mxu0
  %v183 = vadd.f32 %v37, %v182
  %v184 = vpop.f32.mrf.mxu0
  %v185 = vpop.f32.mrf.mxu0
  %v186 = vadd.f32 %v37, %v185
  %v187 = vpop.f32.mrf.mxu0
  %188 = vmatprep.mubr.bf16.mxu0 0
  %189 = vmatmul.mubr.bf16.gmra.mxu0 %v99
  %v190 = vpop.f32.mrf.mxu0
  %v191 = vadd.f32 %v37, %v190
  %v192 = vpop.f32.mrf.mxu0
  %v193 = vpop.f32.mrf.mxu0
  %v194 = vadd.f32 %v37, %v193
  %v195 = vpop.f32.mrf.mxu0
  %196 = vmatprep.mubr.bf16.mxu0 0
  %197 = vmatmul.mubr.bf16.gmra.mxu0 %v102
  %v198 = vpop.f32.mrf.mxu0
  %v199 = vadd.f32 %v37, %v198
  %v200 = vpop.f32.mrf.mxu0
  %v201 = vpop.f32.mrf.mxu0
  %v202 = vadd.f32 %v37, %v201
  %v203 = vpop.f32.mrf.mxu0
  %204 = vdwg.mxu0
  %v205 = vxor.u32 %v143, 2147483648
  %v206 = vxor.u32 %v146, 2147483648
  %v207 = vxor.u32 %v151, 2147483648
  %v208 = vxor.u32 %v154, 2147483648
  %v209 = vxor.u32 %v159, 2147483648
  %v210 = vxor.u32 %v162, 2147483648
  %v211 = vxor.u32 %v167, 2147483648
  %v212 = vxor.u32 %v170, 2147483648
  %v213 = vxor.u32 %v175, 2147483648
  %v214 = vxor.u32 %v178, 2147483648
  %v215 = vxor.u32 %v183, 2147483648
  %v216 = vxor.u32 %v186, 2147483648
  %v217 = vxor.u32 %v191, 2147483648
  %v218 = vxor.u32 %v194, 2147483648
  %v219 = vxor.u32 %v199, 2147483648
  %v220 = vxor.u32 %v202, 2147483648
  %v221 = vmul.f32 %v205, 1.442695
  %v222 = vpow.pop %v221
  %v223 = vmul.f32 %v206, 1.442695
  %v224 = vpow.pop %v223
  %v225 = vmul.f32 %v207, 1.442695
  %v226 = vpow.pop %v225
  %v227 = vmul.f32 %v208, 1.442695
  %v228 = vpow.pop %v227
  %v229 = vmul.f32 %v209, 1.442695
  %v230 = vpow.pop %v229
  %v231 = vmul.f32 %v210, 1.442695
  %v232 = vpow.pop %v231
  %v233 = vmul.f32 %v211, 1.442695
  %v234 = vpow.pop %v233
  %v235 = vmul.f32 %v212, 1.442695
  %v236 = vpow.pop %v235
  %v237 = vmul.f32 %v213, 1.442695
  %v238 = vpow.pop %v237
  %v239 = vmul.f32 %v214, 1.442695
  %v240 = vpow.pop %v239
  %v241 = vmul.f32 %v215, 1.442695
  %v242 = vpow.pop %v241
  %v243 = vmul.f32 %v216, 1.442695
  %v244 = vpow.pop %v243
  %v245 = vmul.f32 %v217, 1.442695
  %v246 = vpow.pop %v245
  %v247 = vmul.f32 %v218, 1.442695
  %v248 = vpow.pop %v247
  %v249 = vmul.f32 %v219, 1.442695
  %v250 = vpow.pop %v249
  %v251 = vmul.f32 %v220, 1.442695
  %v252 = vpow.pop %v251
  %v253 = vadd.f32 %v222, 1.0
  %v254 = vadd.f32 %v224, 1.0
  %v255 = vadd.f32 %v226, 1.0
  %v256 = vadd.f32 %v228, 1.0
  %v257 = vadd.f32 %v230, 1.0
  %v258 = vadd.f32 %v232, 1.0
  %v259 = vadd.f32 %v234, 1.0
  %v260 = vadd.f32 %v236, 1.0
  %v261 = vadd.f32 %v238, 1.0
  %v262 = vadd.f32 %v240, 1.0
  %v263 = vadd.f32 %v242, 1.0
  %v264 = vadd.f32 %v244, 1.0
  %v265 = vadd.f32 %v246, 1.0
  %v266 = vadd.f32 %v248, 1.0
  %v267 = vadd.f32 %v250, 1.0
  %v268 = vadd.f32 %v252, 1.0
  %v269 = vrcp.pop %v253
  %v270 = vmul.f32 1.0, %v269
  %v271 = vrcp.pop %v254
  %v272 = vmul.f32 1.0, %v271
  %v273 = vrcp.pop %v255
  %v274 = vmul.f32 1.0, %v273
  %v275 = vrcp.pop %v256
  %v276 = vmul.f32 1.0, %v275
  %v277 = vrcp.pop %v257
  %v278 = vmul.f32 1.0, %v277
  %v279 = vrcp.pop %v258
  %v280 = vmul.f32 1.0, %v279
  %v281 = vrcp.pop %v259
  %v282 = vmul.f32 1.0, %v281
  %v283 = vrcp.pop %v260
  %v284 = vmul.f32 1.0, %v283
  %v285 = vrcp.pop %v261
  %v286 = vmul.f32 1.0, %v285
  %v287 = vrcp.pop %v262
  %v288 = vmul.f32 1.0, %v287
  %v289 = vrcp.pop %v263
  %v290 = vmul.f32 1.0, %v289
  %v291 = vrcp.pop %v264
  %v292 = vmul.f32 1.0, %v291
  %v293 = vrcp.pop %v265
  %v294 = vmul.f32 1.0, %v293
  %v295 = vrcp.pop %v266
  %v296 = vmul.f32 1.0, %v295
  %v297 = vrcp.pop %v267
  %v298 = vmul.f32 1.0, %v297
  %v299 = vrcp.pop %v268
  %v300 = vmul.f32 1.0, %v299
  %v301 = vmul.f32 %v143, %v270
  %v302 = vmul.f32 %v146, %v272
  %v303 = vmul.f32 %v151, %v274
  %v304 = vmul.f32 %v154, %v276
  %v305 = vmul.f32 %v159, %v278
  %v306 = vmul.f32 %v162, %v280
  %v307 = vmul.f32 %v167, %v282
  %v308 = vmul.f32 %v170, %v284
  %v309 = vmul.f32 %v175, %v286
  %v310 = vmul.f32 %v178, %v288
  %v311 = vmul.f32 %v183, %v290
  %v312 = vmul.f32 %v186, %v292
  %v313 = vmul.f32 %v191, %v294
  %v314 = vmul.f32 %v194, %v296
  %v315 = vmul.f32 %v199, %v298
  %v316 = vmul.f32 %v202, %v300
  %v317 = vpack.c.bf16 %v302, %v301
  %v318 = vpack.c.bf16 %v304, %v303
  %v319 = vpack.c.bf16 %v306, %v305
  %v320 = vpack.c.bf16 %v308, %v307
  %v321 = vpack.c.bf16 %v310, %v309
  %v322 = vpack.c.bf16 %v312, %v311
  %v323 = vpack.c.bf16 %v314, %v313
  %v324 = vpack.c.bf16 %v316, %v315
  %v333 = vunpack.c.l.b16 %v317
  %v334 = vunpack.c.h.b16 %v317
  %v335 = vunpack.c.l.b16 %v318
  %v336 = vunpack.c.h.b16 %v318
  %v337 = vunpack.c.l.b16 %v319
  %v338 = vunpack.c.h.b16 %v319
  %v339 = vunpack.c.l.b16 %v320
  %v340 = vunpack.c.h.b16 %v320
  %v341 = vunpack.c.l.b16 %v321
  %v342 = vunpack.c.h.b16 %v321
  %v343 = vunpack.c.l.b16 %v322
  %v344 = vunpack.c.h.b16 %v322
  %v345 = vunpack.c.l.b16 %v323
  %v346 = vunpack.c.h.b16 %v323
  %v347 = vunpack.c.l.b16 %v324
  %v348 = vunpack.c.h.b16 %v324
  %v349 = vpack.c.b16 %v333, %v333
  %v350 = vpack.c.b16 %v334, %v334
  %v351 = vpack.c.b16 %v335, %v335
  %v352 = vpack.c.b16 %v336, %v336
  %v353 = vpack.c.b16 %v337, %v337
  %v354 = vpack.c.b16 %v338, %v338
  %v355 = vpack.c.b16 %v339, %v339
  %v356 = vpack.c.b16 %v340, %v340
  %v357 = vpack.c.b16 %v341, %v341
  %v358 = vpack.c.b16 %v342, %v342
  %v359 = vpack.c.b16 %v343, %v343
  %v360 = vpack.c.b16 %v344, %v344
  %v361 = vpack.c.b16 %v345, %v345
  %v362 = vpack.c.b16 %v346, %v346
  %v363 = vpack.c.b16 %v347, %v347
  %v364 = vpack.c.b16 %v348, %v348
  %381 = vst [vmem:[%s3] sm:$0xf] %v349
  %382 = vst [vmem:[%s3 + $0x4] sm:$0xf] %v350
  %383 = vst [vmem:[%s3 + $0x8] sm:$0xf] %v351
  %384 = vst [vmem:[%s3 + $0xc] sm:$0xf] %v352
  %385 = vst [vmem:[%s3 + $0x10] sm:$0xf] %v353
  %386 = vst [vmem:[%s3 + $0x14] sm:$0xf] %v354
  %387 = vst [vmem:[%s3 + $0x18] sm:$0xf] %v355
  %388 = vst [vmem:[%s3 + $0x1c] sm:$0xf] %v356
  %389 = vst [vmem:[%s3 + $0x20] sm:$0xf] %v357
  %390 = vst [vmem:[%s3 + $0x24] sm:$0xf] %v358
  %391 = vst [vmem:[%s3 + $0x28] sm:$0xf] %v359
  %392 = vst [vmem:[%s3 + $0x2c] sm:$0xf] %v360
  %393 = vst [vmem:[%s3 + $0x30] sm:$0xf] %v361
  %394 = vst [vmem:[%s3 + $0x34] sm:$0xf] %v362
  %395 = vst [vmem:[%s3 + $0x38] sm:$0xf] %v363
  %396 = vst [vmem:[%s3 + $0x3c] sm:$0xf] %v364
  // Predicated region
  $region14: #{a_call__.6} parent=0 // pred_check
    _
  $region15: #{a_call__.6} parent=0 // pred_check_branch
    %398 = sbr.rel (0) target = $region17
  $region16: #{a_call__.6} parent=0 // pred_region
    _
  $region17: #{a_call__.6} parent=0 // pred_fallthru
    _
  // Predicated region
  $region18: #{a_call__.6} parent=0 // pred_check
    _
  $region19: #{a_call__.6} parent=0 // pred_check_branch
    %400 = sbr.rel (0) target = $region21
  $region20: #{a_call__.6} parent=0 // pred_region
    _
  $region21: #{a_call__.6} parent=0 // pred_fallthru
    _

// kernel: a_call__.7
$region0: #{a_call__.7}
  #allocation0 [shape = 'u32[]', space=smem, size = 0x4, offset = 0x4, fixed_abs, tag = 'smem constant byte address 0x4 - core index']
  #allocation1 [shape = 'u32[144,128]{1,0:T(1,128)}', space=vmem, size = 0x12000, scoped, tag = 'internal scratch']
  %s0 = inlined_call_operand.vmem [shape: bf16[32,128], index: 0, kind: input, shape index: {}]
  %s1 = inlined_call_operand.vmem [shape: bf16[128,128], index: 1, kind: input, shape index: {}]
  %s2 = inlined_call_operand.vmem [shape: f32[1,128], index: 2, kind: input, shape index: {}]
  %s3 = inlined_call_operand.vmem [shape: bf16[32,128], index: 3, kind: output, shape index: {}]
  %s4 = sld [smem:[#allocation0]]
  $region22: #{a_call__.7} parent=0
    _
  %s6 = ssub.s32 1, %s4
  %s7 = scalar_select 0, %s6, %s4
  // Predicated region
  $region2: #{a_call__.7} parent=0 // pred_check
    _
  $region3: #{a_call__.7} parent=0 // pred_check_branch
    %9 = sbr.rel (0) target = $region5
  $region4: #{a_call__.7} parent=0 // pred_region
    _
  $region5: #{a_call__.7} parent=0 // pred_fallthru
    _
  // Predicated region
  $region6: #{a_call__.7} parent=0 // pred_check
    _
  $region7: #{a_call__.7} parent=0 // pred_check_branch
    %11 = sbr.rel (0) target = $region9
  $region8: #{a_call__.7} parent=0 // pred_region
    _
  $region9: #{a_call__.7} parent=0 // pred_fallthru
    _
  // Predicated region
  $region10: #{a_call__.7} parent=0 // pred_check
    _
  $region11: #{a_call__.7} parent=0 // pred_check_branch
    %13 = sbr.rel (0) target = $region13
  $region12: #{a_call__.7} parent=0 // pred_region
    _
  $region13: #{a_call__.7} parent=0 // pred_fallthru
    _
  %v15 = vld [vmem:[%s0] sm:$0xf]
  %v16 = vld [vmem:[%s0 + $0x4] sm:$0xf]
  %v17 = vld [vmem:[%s0 + $0x8] sm:$0xf]
  %v18 = vld [vmem:[%s0 + $0xc] sm:$0xf]
  %v19 = vld [vmem:[%s1] sm:$0xf]
  %v20 = vld [vmem:[%s1 + $0x4] sm:$0xf]
  %v21 = vld [vmem:[%s1 + $0x8] sm:$0xf]
  %v22 = vld [vmem:[%s1 + $0xc] sm:$0xf]
  %v23 = vld [vmem:[%s1 + $0x10] sm:$0xf]
  %v24 = vld [vmem:[%s1 + $0x14] sm:$0xf]
  %v25 = vld [vmem:[%s1 + $0x18] sm:$0xf]
  %v26 = vld [vmem:[%s1 + $0x1c] sm:$0xf]
  %v27 = vld [vmem:[%s1 + $0x20] sm:$0xf]
  %v28 = vld [vmem:[%s1 + $0x24] sm:$0xf]
  %v29 = vld [vmem:[%s1 + $0x28] sm:$0xf]
  %v30 = vld [vmem:[%s1 + $0x2c] sm:$0xf]
  %v31 = vld [vmem:[%s1 + $0x30] sm:$0xf]
  %v32 = vld [vmem:[%s1 + $0x34] sm:$0xf]
  %v33 = vld [vmem:[%s1 + $0x38] sm:$0xf]
  %v34 = vld [vmem:[%s1 + $0x3c] sm:$0xf]
  %v35 = vld [vmem:[%s2] sm:$0x1]
  %v37 = vlaneseq
  %v38 = vshrl.u32 %v37, 7
  %v39 = vsub.s32 0, %v38
  %v40 = vrot.slane %v35, %v39
  %v46 = vunpack.c.l.b16 %v15
  %v47 = vunpack.c.l.b16 %v16
  %v48 = vunpack.c.l.b16 %v17
  %v49 = vunpack.c.l.b16 %v18
  %v50 = vpack.c.b16 %v47, %v46
  %v51 = vpack.c.b16 %v49, %v48
  %v70 = vunpack.c.l.b16 %v19
  %v71 = vunpack.c.l.b16 %v20
  %v72 = vunpack.c.l.b16 %v21
  %v73 = vunpack.c.l.b16 %v22
  %v74 = vunpack.c.l.b16 %v23
  %v75 = vunpack.c.l.b16 %v24
  %v76 = vunpack.c.l.b16 %v25
  %v77 = vunpack.c.l.b16 %v26
  %v78 = vunpack.c.l.b16 %v27
  %v79 = vunpack.c.l.b16 %v28
  %v80 = vunpack.c.l.b16 %v29
  %v81 = vunpack.c.l.b16 %v30
  %v82 = vunpack.c.l.b16 %v31
  %v83 = vunpack.c.l.b16 %v32
  %v84 = vunpack.c.l.b16 %v33
  %v85 = vunpack.c.l.b16 %v34
  %v86 = vpack.c.b16 %v71, %v70
  %v87 = vpack.c.b16 %v73, %v72
  %v88 = vpack.c.b16 %v75, %v74
  %v89 = vpack.c.b16 %v77, %v76
  %v90 = vpack.c.b16 %v79, %v78
  %v91 = vpack.c.b16 %v81, %v80
  %v92 = vpack.c.b16 %v83, %v82
  %v93 = vpack.c.b16 %v85, %v84
  %102 = vmatprep.subr.bf16.mxu0 0
  %103 = vmatpush1.bf16.msra.mxu0 %v93
  %104 = vmatprep.subr.bf16.mxu0 0
  %105 = vmatpush1.bf16.msra.mxu0 %v92
  %106 = vmatprep.subr.bf16.mxu0 0
  %107 = vmatpush1.bf16.msra.mxu0 %v91
  %108 = vmatprep.subr.bf16.mxu0 0
  %109 = vmatpush1.bf16.msra.mxu0 %v90
  %110 = vmatprep.subr.bf16.mxu0 0
  %111 = vmatpush1.bf16.msra.mxu0 %v89
  %112 = vmatprep.subr.bf16.mxu0 0
  %113 = vmatpush1.bf16.msra.mxu0 %v88
  %114 = vmatprep.subr.bf16.mxu0 0
  %115 = vmatpush1.bf16.msra.mxu0 %v87
  %116 = vmatprep.subr.bf16.mxu0 0
  %117 = vmatpush1.bf16.msra.mxu0 %v86
  %118 = vmatprep.subr.bf16.mxu0 0
  %119 = vmatpush2.bf16.msra.mxu0 0
  %120 = vmatprep.subr.bf16.mxu0 0
  %121 = vmatpush2.bf16.msra.mxu0 0
  %122 = vmatprep.subr.bf16.mxu0 0
  %123 = vmatpush2.bf16.msra.mxu0 0
  %124 = vmatprep.subr.bf16.mxu0 0
  %125 = vmatpush2.bf16.msra.mxu0 0
  %126 = vmatprep.subr.bf16.mxu0 0
  %127 = vmatpush2.bf16.msra.mxu0 0
  %128 = vmatprep.subr.bf16.mxu0 0
  %129 = vmatpush2.bf16.msra.mxu0 0
  %130 = vmatprep.subr.bf16.mxu0 0
  %131 = vmatpush2.bf16.msra.mxu0 0
  %132 = vmatprep.subr.bf16.mxu0 0
  %133 = vmatpush2.bf16.msra.mxu0 0
  %134 = vmatprep.mubr.bf16.mxu0 0
  %135 = vmatmul.mubr.bf16.gmra.mxu0 %v50
  %v136 = vpop.f32.mrf.mxu0
  %v137 = vadd.f32 %v40, %v136
  %v138 = vpop.f32.mrf.mxu0
  %v139 = vpop.f32.mrf.mxu0
  %v140 = vadd.f32 %v40, %v139
  %v141 = vpop.f32.mrf.mxu0
  %142 = vmatprep.mubr.bf16.mxu0 0
  %143 = vmatmul.mubr.bf16.gmra.mxu0 %v51
  %v144 = vpop.f32.mrf.mxu0
  %v145 = vadd.f32 %v40, %v144
  %v146 = vpop.f32.mrf.mxu0
  %v147 = vpop.f32.mrf.mxu0
  %v148 = vadd.f32 %v40, %v147
  %v149 = vpop.f32.mrf.mxu0
  %150 = vdwg.mxu0
  %v151 = vxor.u32 %v137, 2147483648
  %v152 = vxor.u32 %v140, 2147483648
  %v153 = vxor.u32 %v145, 2147483648
  %v154 = vxor.u32 %v148, 2147483648
  %v155 = vmul.f32 %v151, 1.442695
  %v156 = vpow.pop %v155
  %v157 = vmul.f32 %v152, 1.442695
  %v158 = vpow.pop %v157
  %v159 = vmul.f32 %v153, 1.442695
  %v160 = vpow.pop %v159
  %v161 = vmul.f32 %v154, 1.442695
  %v162 = vpow.pop %v161
  %v163 = vadd.f32 %v156, 1.0
  %v164 = vadd.f32 %v158, 1.0
  %v165 = vadd.f32 %v160, 1.0
  %v166 = vadd.f32 %v162, 1.0
  %v167 = vrcp.pop %v163
  %v168 = vmul.f32 1.0, %v167
  %v169 = vrcp.pop %v164
  %v170 = vmul.f32 1.0, %v169
  %v171 = vrcp.pop %v165
  %v172 = vmul.f32 1.0, %v171
  %v173 = vrcp.pop %v166
  %v174 = vmul.f32 1.0, %v173
  %v175 = vmul.f32 %v137, %v168
  %v176 = vmul.f32 %v140, %v170
  %v177 = vmul.f32 %v145, %v172
  %v178 = vmul.f32 %v148, %v174
  %v179 = vpack.c.bf16 %v176, %v175
  %v180 = vpack.c.bf16 %v178, %v177
  %v183 = vunpack.c.l.b16 %v179
  %v184 = vunpack.c.h.b16 %v179
  %v185 = vunpack.c.l.b16 %v180
  %v186 = vunpack.c.h.b16 %v180
  %v187 = vpack.c.b16 %v183, %v183
  %v188 = vpack.c.b16 %v184, %v184
  %v189 = vpack.c.b16 %v185, %v185
  %v190 = vpack.c.b16 %v186, %v186
  %195 = vst [vmem:[%s3] sm:$0xf] %v187
  %196 = vst [vmem:[%s3 + $0x4] sm:$0xf] %v188
  %197 = vst [vmem:[%s3 + $0x8] sm:$0xf] %v189
  %198 = vst [vmem:[%s3 + $0xc] sm:$0xf] %v190
  // Predicated region
  $region14: #{a_call__.7} parent=0 // pred_check
    _
  $region15: #{a_call__.7} parent=0 // pred_check_branch
    %200 = sbr.rel (0) target = $region17
  $region16: #{a_call__.7} parent=0 // pred_region
    _
  $region17: #{a_call__.7} parent=0 // pred_fallthru
    _
  // Predicated region
  $region18: #{a_call__.7} parent=0 // pred_check
    _
  $region19: #{a_call__.7} parent=0 // pred_check_branch
    %202 = sbr.rel (0) target = $region21
  $region20: #{a_call__.7} parent=0 // pred_region
    _
  $region21: #{a_call__.7} parent=0 // pred_fallthru
    _

// kernel: a_call__.11
$region0: #{a_call__.11}
  #allocation0 [shape = 'u32[]', space=smem, size = 0x4, offset = 0x4, fixed_abs, tag = 'smem constant byte address 0x4 - core index']
  #allocation1 [shape = 'u32[144,128]{1,0:T(1,128)}', space=vmem, size = 0x12000, scoped, tag = 'internal scratch']
  %s0 = inlined_call_operand.vmem [shape: bf16[8,128], index: 0, kind: input, shape index: {}]
  %s1 = inlined_call_operand.vmem [shape: bf16[128,128], index: 1, kind: input, shape index: {}]
  %s2 = inlined_call_operand.vmem [shape: f32[1,128], index: 2, kind: input, shape index: {}]
  %s3 = inlined_call_operand.vmem [shape: f32[8,2], index: 3, kind: input, shape index: {}]
  %s4 = inlined_call_operand.vmem [shape: f32[4,128], index: 4, kind: input, shape index: {}]
  %s5 = inlined_call_operand.vmem [shape: f32[8,128], index: 5, kind: output, shape index: {0}]
  %s6 = inlined_call_operand.vmem [shape: f32[8,128], index: 6, kind: output, shape index: {1}]
  %7 = xla_tuple %s5, %s6
  %s8 = sld [smem:[#allocation0]]
  $region38: #{a_call__.11} parent=0
    _
  %s10 = ssub.s32 1, %s8
  %s11 = scalar_select 0, %s10, %s8
  // Predicated region
  $region2: #{a_call__.11} parent=0 // pred_check
    _
  $region3: #{a_call__.11} parent=0 // pred_check_branch
    %13 = sbr.rel (0) target = $region5
  $region4: #{a_call__.11} parent=0 // pred_region
    _
  $region5: #{a_call__.11} parent=0 // pred_fallthru
    _
  // Predicated region
  $region6: #{a_call__.11} parent=0 // pred_check
    _
  $region7: #{a_call__.11} parent=0 // pred_check_branch
    %15 = sbr.rel (0) target = $region9
  $region8: #{a_call__.11} parent=0 // pred_region
    _
  $region9: #{a_call__.11} parent=0 // pred_fallthru
    _
  // Predicated region
  $region10: #{a_call__.11} parent=0 // pred_check
    _
  $region11: #{a_call__.11} parent=0 // pred_check_branch
    %17 = sbr.rel (0) target = $region13
  $region12: #{a_call__.11} parent=0 // pred_region
    _
  $region13: #{a_call__.11} parent=0 // pred_fallthru
    _
  // Predicated region
  $region14: #{a_call__.11} parent=0 // pred_check
    _
  $region15: #{a_call__.11} parent=0 // pred_check_branch
    %19 = sbr.rel (0) target = $region17
  $region16: #{a_call__.11} parent=0 // pred_region
    _
  $region17: #{a_call__.11} parent=0 // pred_fallthru
    _
  // Predicated region
  $region18: #{a_call__.11} parent=0 // pred_check
    _
  $region19: #{a_call__.11} parent=0 // pred_check_branch
    %21 = sbr.rel (0) target = $region21
  $region20: #{a_call__.11} parent=0 // pred_region
    _
  $region21: #{a_call__.11} parent=0 // pred_fallthru
    _
  %v23 = vld [vmem:[%s0] sm:$0xf]
  %v24 = vld [vmem:[%s1] sm:$0xf]
  %v25 = vld [vmem:[%s1 + $0x4] sm:$0xf]
  %v26 = vld [vmem:[%s1 + $0x8] sm:$0xf]
  %v27 = vld [vmem:[%s1 + $0xc] sm:$0xf]
  %v28 = vld [vmem:[%s1 + $0x10] sm:$0xf]
  %v29 = vld [vmem:[%s1 + $0x14] sm:$0xf]
  %v30 = vld [vmem:[%s1 + $0x18] sm:$0xf]
  %v31 = vld [vmem:[%s1 + $0x1c] sm:$0xf]
  %v32 = vld [vmem:[%s1 + $0x20] sm:$0xf]
  %v33 = vld [vmem:[%s1 + $0x24] sm:$0xf]
  %v34 = vld [vmem:[%s1 + $0x28] sm:$0xf]
  %v35 = vld [vmem:[%s1 + $0x2c] sm:$0xf]
  %v36 = vld [vmem:[%s1 + $0x30] sm:$0xf]
  %v37 = vld [vmem:[%s1 + $0x34] sm:$0xf]
  %v38 = vld [vmem:[%s1 + $0x38] sm:$0xf]
  %v39 = vld [vmem:[%s1 + $0x3c] sm:$0xf]
  %v40 = vld [vmem:[%s2] sm:$0x1]
  %v42 = vlaneseq
  %v43 = vshrl.u32 %v42, 7
  %v44 = vsub.s32 0, %v43
  %v45 = vrot.slane %v40, %v44
  %v63 = vunpack.c.l.b16 %v24
  %v64 = vunpack.c.l.b16 %v25
  %v65 = vunpack.c.l.b16 %v26
  %v66 = vunpack.c.l.b16 %v27
  %v67 = vunpack.c.l.b16 %v28
  %v68 = vunpack.c.l.b16 %v29
  %v69 = vunpack.c.l.b16 %v30
  %v70 = vunpack.c.l.b16 %v31
  %v71 = vunpack.c.l.b16 %v32
  %v72 = vunpack.c.l.b16 %v33
  %v73 = vunpack.c.l.b16 %v34
  %v74 = vunpack.c.l.b16 %v35
  %v75 = vunpack.c.l.b16 %v36
  %v76 = vunpack.c.l.b16 %v37
  %v77 = vunpack.c.l.b16 %v38
  %v78 = vunpack.c.l.b16 %v39
  %v79 = vpack.c.b16 %v64, %v63
  %v80 = vpack.c.b16 %v66, %v65
  %v81 = vpack.c.b16 %v68, %v67
  %v82 = vpack.c.b16 %v70, %v69
  %v83 = vpack.c.b16 %v72, %v71
  %v84 = vpack.c.b16 %v74, %v73
  %v85 = vpack.c.b16 %v76, %v75
  %v86 = vpack.c.b16 %v78, %v77
  %95 = vmatprep.subr.bf16.mxu0 0
  %96 = vmatpush1.bf16.msra.mxu0 %v86
  %97 = vmatprep.subr.bf16.mxu0 0
  %98 = vmatpush1.bf16.msra.mxu0 %v85
  %99 = vmatprep.subr.bf16.mxu0 0
  %100 = vmatpush1.bf16.msra.mxu0 %v84
  %101 = vmatprep.subr.bf16.mxu0 0
  %102 = vmatpush1.bf16.msra.mxu0 %v83
  %103 = vmatprep.subr.bf16.mxu0 0
  %104 = vmatpush1.bf16.msra.mxu0 %v82
  %105 = vmatprep.subr.bf16.mxu0 0
  %106 = vmatpush1.bf16.msra.mxu0 %v81
  %107 = vmatprep.subr.bf16.mxu0 0
  %108 = vmatpush1.bf16.msra.mxu0 %v80
  %109 = vmatprep.subr.bf16.mxu0 0
  %110 = vmatpush1.bf16.msra.mxu0 %v79
  %111 = vmatprep.subr.bf16.mxu0 0
  %112 = vmatpush2.bf16.msra.mxu0 0
  %113 = vmatprep.subr.bf16.mxu0 0
  %114 = vmatpush2.bf16.msra.mxu0 0
  %115 = vmatprep.subr.bf16.mxu0 0
  %116 = vmatpush2.bf16.msra.mxu0 0
  %117 = vmatprep.subr.bf16.mxu0 0
  %118 = vmatpush2.bf16.msra.mxu0 0
  %119 = vmatprep.subr.bf16.mxu0 0
  %120 = vmatpush2.bf16.msra.mxu0 0
  %121 = vmatprep.subr.bf16.mxu0 0
  %122 = vmatpush2.bf16.msra.mxu0 0
  %123 = vmatprep.subr.bf16.mxu0 0
  %124 = vmatpush2.bf16.msra.mxu0 0
  %125 = vmatprep.subr.bf16.mxu0 0
  %126 = vmatpush2.bf16.msra.mxu0 0
  %127 = vmatprep.mubr.bf16.mxu0 0
  %128 = vmatmul.mubr.bf16.gmra.mxu0 %v23
  %v129 = vpop.f32.mrf.mxu0
  %v130 = vadd.f32 %v45, %v129
  %v131 = vpop.f32.mrf.mxu0
  %v132 = vpop.f32.mrf.mxu0
  %v133 = vpop.f32.mrf.mxu0
  %134 = vdwg.mxu0
  %135 = vst [vmem:[%s5] sm:$0xff] %v130
  %v136 = vxor.u32 %v130, 2147483648
  %v137 = vmul.f32 %v136, 1.442695
  %v138 = vpow.pop %v137
  %v139 = vadd.f32 %v138, 1.0
  %v140 = vrcp.pop %v139
  %v141 = vmul.f32 1.0, %v140
  %v142 = vld [vmem:[%s4] sm:$0x1]
  %v143 = vld [vmem:[%s4 + $0x1] sm:$0x1]
  %v144 = vld [vmem:[%s4 + $0x2] sm:$0x1]
  %v145 = vld [vmem:[%s4 + $0x3] sm:$0x1]
  %v146 = vld [vmem:[%s3] sm:$0xff]
  %v147 = vlaneseq
  %v148 = vshrl.u32 %v147, 7
  %v149 = vsub.s32 0, %v148
  %v150 = vrot.slane %v142, %v149
  %152 = vset.pattern.permute.xlu0 0
  %153 = vperm.xlu0 %152, %v146
  %v154 = vpop.permute.xlu0 %153
  %v156 = vmul.f32 %v150, %v154
  %v157 = vlaneseq
  %v158 = vshrl.u32 %v157, 7
  %v159 = vsub.s32 0, %v158
  %v160 = vrot.slane %v143, %v159
  %161 = vset.pattern.permute.xlu0 1
  %162 = vperm.xlu0 %161, %v146
  %v163 = vpop.permute.xlu0 %162
  %v165 = vmul.f32 %v160, %v163
  %v166 = vadd.f32 %v156, %v165
  %v167 = vadd.f32 %v142, %v143
  %v168 = vmul.f32 %v141, 2.0
  %v169 = vadd.f32 %v168, %v166
  %v170 = vmul.f32 %v169, 32.0
  %v171 = vmul.f32 %v168, %v168
  %v172 = vlaneseq
  %v173 = vshrl.u32 %v172, 7
  %v174 = vsub.s32 0, %v173
  %v175 = vrot.slane %v145, %v174
  %v176 = vmul.f32 %v171, %v175
  %vm177 = vcmp.gt.f32.partialorder %v167, 0.0
  %vm178 = vcmp.gt.f32.partialorder %v144, 0.0
  %v179 = vsel %vm178, 1, 0
  %v180 = vlaneseq
  %v181 = vshrl.u32 %v180, 7
  %v182 = vsub.s32 0, %v181
  %v183 = vrot.slane %v179, %v182
  %vm184 = vcmp.eq.s32.totalorder %v183, 1
  %v185 = vsel %vm184, %v176, %v141
  %v186 = vsel %vm177, 1, 0
  %v187 = vlaneseq
  %v188 = vshrl.u32 %v187, 7
  %v189 = vsub.s32 0, %v188
  %v190 = vrot.slane %v186, %v189
  %vm191 = vcmp.eq.s32.totalorder %v190, 1
  %v192 = vsel %vm191, %v170, %v185
  %193 = vst [vmem:[%s6] sm:$0xff] %v192
  // Predicated region
  $region22: #{a_call__.11} parent=0 // pred_check
    _
  $region23: #{a_call__.11} parent=0 // pred_check_branch
    %195 = sbr.rel (0) target = $region25
  $region24: #{a_call__.11} parent=0 // pred_region
    _
  $region25: #{a_call__.11} parent=0 // pred_fallthru
    _
  // Predicated region
  $region26: #{a_call__.11} parent=0 // pred_check
    _
  $region27: #{a_call__.11} parent=0 // pred_check_branch
    %197 = sbr.rel (0) target = $region29
  $region28: #{a_call__.11} parent=0 // pred_region
    _
  $region29: #{a_call__.11} parent=0 // pred_fallthru
    _
  // Predicated region
  $region30: #{a_call__.11} parent=0 // pred_check
    _
  $region31: #{a_call__.11} parent=0 // pred_check_branch
    %199 = sbr.rel (0) target = $region33
  $region32: #{a_call__.11} parent=0 // pred_region
    _
  $region33: #{a_call__.11} parent=0 // pred_fallthru
    _
  // Predicated region
  $region34: #{a_call__.11} parent=0 // pred_check
    _
  $region35: #{a_call__.11} parent=0 // pred_check_branch
    %201 = sbr.rel (0) target = $region37
  $region36: #{a_call__.11} parent=0 // pred_region
    _
  $region37: #{a_call__.11} parent=0 // pred_fallthru
    _

// kernel: a_call__.10
$region0: #{a_call__.10}
  #allocation0 [shape = 'u32[]', space=smem, size = 0x4, offset = 0x4, fixed_abs, tag = 'smem constant byte address 0x4 - core index']
  #allocation1 [shape = 'u32[144,128]{1,0:T(1,128)}', space=vmem, size = 0x12000, scoped, tag = 'internal scratch']
  %s0 = inlined_call_operand.vmem [shape: bf16[32,128], index: 0, kind: input, shape index: {}]
  %s1 = inlined_call_operand.vmem [shape: bf16[128,128], index: 1, kind: input, shape index: {}]
  %s2 = inlined_call_operand.vmem [shape: f32[1,128], index: 2, kind: input, shape index: {}]
  %s3 = inlined_call_operand.vmem [shape: f32[32,2], index: 3, kind: input, shape index: {}]
  %s4 = inlined_call_operand.vmem [shape: f32[4,128], index: 4, kind: input, shape index: {}]
  %s5 = inlined_call_operand.vmem [shape: f32[32,128], index: 5, kind: output, shape index: {0}]
  %s6 = inlined_call_operand.vmem [shape: f32[32,128], index: 6, kind: output, shape index: {1}]
  %7 = xla_tuple %s5, %s6
  %s8 = sld [smem:[#allocation0]]
  $region38: #{a_call__.10} parent=0
    _
  %s10 = ssub.s32 1, %s8
  %s11 = scalar_select 0, %s10, %s8
  // Predicated region
  $region2: #{a_call__.10} parent=0 // pred_check
    _
  $region3: #{a_call__.10} parent=0 // pred_check_branch
    %13 = sbr.rel (0) target = $region5
  $region4: #{a_call__.10} parent=0 // pred_region
    _
  $region5: #{a_call__.10} parent=0 // pred_fallthru
    _
  // Predicated region
  $region6: #{a_call__.10} parent=0 // pred_check
    _
  $region7: #{a_call__.10} parent=0 // pred_check_branch
    %15 = sbr.rel (0) target = $region9
  $region8: #{a_call__.10} parent=0 // pred_region
    _
  $region9: #{a_call__.10} parent=0 // pred_fallthru
    _
  // Predicated region
  $region10: #{a_call__.10} parent=0 // pred_check
    _
  $region11: #{a_call__.10} parent=0 // pred_check_branch
    %17 = sbr.rel (0) target = $region13
  $region12: #{a_call__.10} parent=0 // pred_region
    _
  $region13: #{a_call__.10} parent=0 // pred_fallthru
    _
  // Predicated region
  $region14: #{a_call__.10} parent=0 // pred_check
    _
  $region15: #{a_call__.10} parent=0 // pred_check_branch
    %19 = sbr.rel (0) target = $region17
  $region16: #{a_call__.10} parent=0 // pred_region
    _
  $region17: #{a_call__.10} parent=0 // pred_fallthru
    _
  // Predicated region
  $region18: #{a_call__.10} parent=0 // pred_check
    _
  $region19: #{a_call__.10} parent=0 // pred_check_branch
    %21 = sbr.rel (0) target = $region21
  $region20: #{a_call__.10} parent=0 // pred_region
    _
  $region21: #{a_call__.10} parent=0 // pred_fallthru
    _
  %v23 = vld [vmem:[%s0] sm:$0xf]
  %v24 = vld [vmem:[%s0 + $0x4] sm:$0xf]
  %v25 = vld [vmem:[%s0 + $0x8] sm:$0xf]
  %v26 = vld [vmem:[%s0 + $0xc] sm:$0xf]
  %v27 = vld [vmem:[%s1] sm:$0xf]
  %v28 = vld [vmem:[%s1 + $0x4] sm:$0xf]
  %v29 = vld [vmem:[%s1 + $0x8] sm:$0xf]
  %v30 = vld [vmem:[%s1 + $0xc] sm:$0xf]
  %v31 = vld [vmem:[%s1 + $0x10] sm:$0xf]
  %v32 = vld [vmem:[%s1 + $0x14] sm:$0xf]
  %v33 = vld [vmem:[%s1 + $0x18] sm:$0xf]
  %v34 = vld [vmem:[%s1 + $0x1c] sm:$0xf]
  %v35 = vld [vmem:[%s1 + $0x20] sm:$0xf]
  %v36 = vld [vmem:[%s1 + $0x24] sm:$0xf]
  %v37 = vld [vmem:[%s1 + $0x28] sm:$0xf]
  %v38 = vld [vmem:[%s1 + $0x2c] sm:$0xf]
  %v39 = vld [vmem:[%s1 + $0x30] sm:$0xf]
  %v40 = vld [vmem:[%s1 + $0x34] sm:$0xf]
  %v41 = vld [vmem:[%s1 + $0x38] sm:$0xf]
  %v42 = vld [vmem:[%s1 + $0x3c] sm:$0xf]
  %v43 = vld [vmem:[%s2] sm:$0x1]
  %v45 = vlaneseq
  %v46 = vshrl.u32 %v45, 7
  %v47 = vsub.s32 0, %v46
  %v48 = vrot.slane %v43, %v47
  %v54 = vunpack.c.l.b16 %v23
  %v55 = vunpack.c.l.b16 %v24
  %v56 = vunpack.c.l.b16 %v25
  %v57 = vunpack.c.l.b16 %v26
  %v58 = vpack.c.b16 %v55, %v54
  %v59 = vpack.c.b16 %v57, %v56
  %v78 = vunpack.c.l.b16 %v27
  %v79 = vunpack.c.l.b16 %v28
  %v80 = vunpack.c.l.b16 %v29
  %v81 = vunpack.c.l.b16 %v30
  %v82 = vunpack.c.l.b16 %v31
  %v83 = vunpack.c.l.b16 %v32
  %v84 = vunpack.c.l.b16 %v33
  %v85 = vunpack.c.l.b16 %v34
  %v86 = vunpack.c.l.b16 %v35
  %v87 = vunpack.c.l.b16 %v36
  %v88 = vunpack.c.l.b16 %v37
  %v89 = vunpack.c.l.b16 %v38
  %v90 = vunpack.c.l.b16 %v39
  %v91 = vunpack.c.l.b16 %v40
  %v92 = vunpack.c.l.b16 %v41
  %v93 = vunpack.c.l.b16 %v42
  %v94 = vpack.c.b16 %v79, %v78
  %v95 = vpack.c.b16 %v81, %v80
  %v96 = vpack.c.b16 %v83, %v82
  %v97 = vpack.c.b16 %v85, %v84
  %v98 = vpack.c.b16 %v87, %v86
  %v99 = vpack.c.b16 %v89, %v88
  %v100 = vpack.c.b16 %v91, %v90
  %v101 = vpack.c.b16 %v93, %v92
  %110 = vmatprep.subr.bf16.mxu0 0
  %111 = vmatpush1.bf16.msra.mxu0 %v101
  %112 = vmatprep.subr.bf16.mxu0 0
  %113 = vmatpush1.bf16.msra.mxu0 %v100
  %114 = vmatprep.subr.bf16.mxu0 0
  %115 = vmatpush1.bf16.msra.mxu0 %v99
  %116 = vmatprep.subr.bf16.mxu0 0
  %117 = vmatpush1.bf16.msra.mxu0 %v98
  %118 = vmatprep.subr.bf16.mxu0 0
  %119 = vmatpush1.bf16.msra.mxu0 %v97
  %120 = vmatprep.subr.bf16.mxu0 0
  %121 = vmatpush1.bf16.msra.mxu0 %v96
  %122 = vmatprep.subr.bf16.mxu0 0
  %123 = vmatpush1.bf16.msra.mxu0 %v95
  %124 = vmatprep.subr.bf16.mxu0 0
  %125 = vmatpush1.bf16.msra.mxu0 %v94
  %126 = vmatprep.subr.bf16.mxu0 0
  %127 = vmatpush2.bf16.msra.mxu0 0
  %128 = vmatprep.subr.bf16.mxu0 0
  %129 = vmatpush2.bf16.msra.mxu0 0
  %130 = vmatprep.subr.bf16.mxu0 0
  %131 = vmatpush2.bf16.msra.mxu0 0
  %132 = vmatprep.subr.bf16.mxu0 0
  %133 = vmatpush2.bf16.msra.mxu0 0
  %134 = vmatprep.subr.bf16.mxu0 0
  %135 = vmatpush2.bf16.msra.mxu0 0
  %136 = vmatprep.subr.bf16.mxu0 0
  %137 = vmatpush2.bf16.msra.mxu0 0
  %138 = vmatprep.subr.bf16.mxu0 0
  %139 = vmatpush2.bf16.msra.mxu0 0
  %140 = vmatprep.subr.bf16.mxu0 0
  %141 = vmatpush2.bf16.msra.mxu0 0
  %142 = vmatprep.mubr.bf16.mxu0 0
  %143 = vmatmul.mubr.bf16.gmra.mxu0 %v58
  %v144 = vpop.f32.mrf.mxu0
  %v145 = vadd.f32 %v48, %v144
  %v146 = vpop.f32.mrf.mxu0
  %v147 = vpop.f32.mrf.mxu0
  %v148 = vadd.f32 %v48, %v147
  %v149 = vpop.f32.mrf.mxu0
  %150 = vmatprep.mubr.bf16.mxu0 0
  %151 = vmatmul.mubr.bf16.gmra.mxu0 %v59
  %v152 = vpop.f32.mrf.mxu0
  %v153 = vadd.f32 %v48, %v152
  %v154 = vpop.f32.mrf.mxu0
  %v155 = vpop.f32.mrf.mxu0
  %v156 = vadd.f32 %v48, %v155
  %v157 = vpop.f32.mrf.mxu0
  %158 = vdwg.mxu0
  %159 = vst [vmem:[%s5] sm:$0xff] %v145
  %160 = vst [vmem:[%s5 + $0x8] sm:$0xff] %v148
  %161 = vst [vmem:[%s5 + $0x10] sm:$0xff] %v153
  %162 = vst [vmem:[%s5 + $0x18] sm:$0xff] %v156
  %v163 = vxor.u32 %v145, 2147483648
  %v164 = vxor.u32 %v148, 2147483648
  %v165 = vxor.u32 %v153, 2147483648
  %v166 = vxor.u32 %v156, 2147483648
  %v167 = vmul.f32 %v163, 1.442695
  %v168 = vpow.pop %v167
  %v169 = vmul.f32 %v164, 1.442695
  %v170 = vpow.pop %v169
  %v171 = vmul.f32 %v165, 1.442695
  %v172 = vpow.pop %v171
  %v173 = vmul.f32 %v166, 1.442695
  %v174 = vpow.pop %v173
  %v175 = vadd.f32 %v168, 1.0
  %v176 = vadd.f32 %v170, 1.0
  %v177 = vadd.f32 %v172, 1.0
  %v178 = vadd.f32 %v174, 1.0
  %v179 = vrcp.pop %v175
  %v180 = vmul.f32 1.0, %v179
  %v181 = vrcp.pop %v176
  %v182 = vmul.f32 1.0, %v181
  %v183 = vrcp.pop %v177
  %v184 = vmul.f32 1.0, %v183
  %v185 = vrcp.pop %v178
  %v186 = vmul.f32 1.0, %v185
  %v187 = vld [vmem:[%s4] sm:$0x1]
  %v188 = vld [vmem:[%s4 + $0x1] sm:$0x1]
  %v189 = vld [vmem:[%s4 + $0x2] sm:$0x1]
  %v190 = vld [vmem:[%s4 + $0x3] sm:$0x1]
  %v191 = vld [vmem:[%s3] sm:$0xff]
  %v192 = vld [vmem:[%s3 + $0x8] sm:$0xff]
  %v193 = vld [vmem:[%s3 + $0x10] sm:$0xff]
  %v194 = vld [vmem:[%s3 + $0x18] sm:$0xff]
  %v195 = vlaneseq
  %v196 = vshrl.u32 %v195, 7
  %v197 = vsub.s32 0, %v196
  %v198 = vrot.slane %v187, %v197
  %200 = vset.pattern.permute.xlu0 0
  %201 = vperm.xlu0 %200, %v191
  %v202 = vpop.permute.xlu0 %201
  %205 = vset.pattern.permute.xlu0 0
  %206 = vperm.xlu0 %205, %v192
  %v207 = vpop.permute.xlu0 %206
  %210 = vset.pattern.permute.xlu0 0
  %211 = vperm.xlu0 %210, %v193
  %v212 = vpop.permute.xlu0 %211
  %215 = vset.pattern.permute.xlu0 0
  %216 = vperm.xlu0 %215, %v194
  %v217 = vpop.permute.xlu0 %216
  %v219 = vmul.f32 %v198, %v202
  %v220 = vmul.f32 %v198, %v207
  %v221 = vmul.f32 %v198, %v212
  %v222 = vmul.f32 %v198, %v217
  %v223 = vlaneseq
  %v224 = vshrl.u32 %v223, 7
  %v225 = vsub.s32 0, %v224
  %v226 = vrot.slane %v188, %v225
  %227 = vset.pattern.permute.xlu0 1
  %228 = vperm.xlu0 %227, %v191
  %v229 = vpop.permute.xlu0 %228
  %231 = vset.pattern.permute.xlu0 1
  %232 = vperm.xlu0 %231, %v192
  %v233 = vpop.permute.xlu0 %232
  %235 = vset.pattern.permute.xlu0 1
  %236 = vperm.xlu0 %235, %v193
  %v237 = vpop.permute.xlu0 %236
  %239 = vset.pattern.permute.xlu0 1
  %240 = vperm.xlu0 %239, %v194
  %v241 = vpop.permute.xlu0 %240
  %v243 = vmul.f32 %v226, %v229
  %v244 = vmul.f32 %v226, %v233
  %v245 = vmul.f32 %v226, %v237
  %v246 = vmul.f32 %v226, %v241
  %v247 = vadd.f32 %v219, %v243
  %v248 = vadd.f32 %v220, %v244
  %v249 = vadd.f32 %v221, %v245
  %v250 = vadd.f32 %v222, %v246
  %v251 = vadd.f32 %v187, %v188
  %v252 = vmul.f32 %v180, 2.0
  %v253 = vmul.f32 %v182, 2.0
  %v254 = vmul.f32 %v184, 2.0
  %v255 = vmul.f32 %v186, 2.0
  %v256 = vadd.f32 %v252, %v247
  %v257 = vadd.f32 %v253, %v248
  %v258 = vadd.f32 %v254, %v249
  %v259 = vadd.f32 %v255, %v250
  %v260 = vmul.f32 %v256, 16.0
  %v261 = vmul.f32 %v257, 16.0
  %v262 = vmul.f32 %v258, 16.0
  %v263 = vmul.f32 %v259, 16.0
  %v264 = vmul.f32 %v252, %v252
  %v265 = vmul.f32 %v253, %v253
  %v266 = vmul.f32 %v254, %v254
  %v267 = vmul.f32 %v255, %v255
  %v268 = vlaneseq
  %v269 = vshrl.u32 %v268, 7
  %v270 = vsub.s32 0, %v269
  %v271 = vrot.slane %v190, %v270
  %v272 = vmul.f32 %v264, %v271
  %v273 = vmul.f32 %v265, %v271
  %v274 = vmul.f32 %v266, %v271
  %v275 = vmul.f32 %v267, %v271
  %vm276 = vcmp.gt.f32.partialorder %v251, 0.0
  %vm277 = vcmp.gt.f32.partialorder %v189, 0.0
  %v278 = vsel %vm277, 1, 0
  %v279 = vlaneseq
  %v280 = vshrl.u32 %v279, 7
  %v281 = vsub.s32 0, %v280
  %v282 = vrot.slane %v278, %v281
  %vm283 = vcmp.eq.s32.totalorder %v282, 1
  %v284 = vsel %vm283, %v272, %v180
  %v285 = vsel %vm283, %v273, %v182
  %v286 = vsel %vm283, %v274, %v184
  %v287 = vsel %vm283, %v275, %v186
  %v288 = vsel %vm276, 1, 0
  %v289 = vlaneseq
  %v290 = vshrl.u32 %v289, 7
  %v291 = vsub.s32 0, %v290
  %v292 = vrot.slane %v288, %v291
  %vm293 = vcmp.eq.s32.totalorder %v292, 1
  %v294 = vsel %vm293, %v260, %v284
  %v295 = vsel %vm293, %v261, %v285
  %v296 = vsel %vm293, %v262, %v286
  %v297 = vsel %vm293, %v263, %v287
  %298 = vst [vmem:[%s6] sm:$0xff] %v294
  %299 = vst [vmem:[%s6 + $0x8] sm:$0xff] %v295
  %300 = vst [vmem:[%s6 + $0x10] sm:$0xff] %v296
  %301 = vst [vmem:[%s6 + $0x18] sm:$0xff] %v297
  // Predicated region
  $region22: #{a_call__.10} parent=0 // pred_check
    _
  $region23: #{a_call__.10} parent=0 // pred_check_branch
    %303 = sbr.rel (0) target = $region25
  $region24: #{a_call__.10} parent=0 // pred_region
    _
  $region25: #{a_call__.10} parent=0 // pred_fallthru
    _
  // Predicated region
  $region26: #{a_call__.10} parent=0 // pred_check
    _
  $region27: #{a_call__.10} parent=0 // pred_check_branch
    %305 = sbr.rel (0) target = $region29
  $region28: #{a_call__.10} parent=0 // pred_region
    _
  $region29: #{a_call__.10} parent=0 // pred_fallthru
    _
  // Predicated region
  $region30: #{a_call__.10} parent=0 // pred_check
    _
  $region31: #{a_call__.10} parent=0 // pred_check_branch
    %307 = sbr.rel (0) target = $region33
  $region32: #{a_call__.10} parent=0 // pred_region
    _
  $region33: #{a_call__.10} parent=0 // pred_fallthru
    _
  // Predicated region
  $region34: #{a_call__.10} parent=0 // pred_check
    _
  $region35: #{a_call__.10} parent=0 // pred_check_branch
    %309 = sbr.rel (0) target = $region37
  $region36: #{a_call__.10} parent=0 // pred_region
    _
  $region37: #{a_call__.10} parent=0 // pred_fallthru
    _

// kernel: a_call__.9
$region0: #{a_call__.9}
  #allocation0 [shape = 'u32[]', space=smem, size = 0x4, offset = 0x4, fixed_abs, tag = 'smem constant byte address 0x4 - core index']
  #allocation1 [shape = 'u32[144,128]{1,0:T(1,128)}', space=vmem, size = 0x12000, scoped, tag = 'internal scratch']
  %s0 = inlined_call_operand.vmem [shape: bf16[128,128], index: 0, kind: input, shape index: {}]
  %s1 = inlined_call_operand.vmem [shape: bf16[128,128], index: 1, kind: input, shape index: {}]
  %s2 = inlined_call_operand.vmem [shape: f32[1,128], index: 2, kind: input, shape index: {}]
  %s3 = inlined_call_operand.vmem [shape: f32[128,2], index: 3, kind: input, shape index: {}]
  %s4 = inlined_call_operand.vmem [shape: f32[4,128], index: 4, kind: input, shape index: {}]
  %s5 = inlined_call_operand.vmem [shape: f32[128,128], index: 5, kind: output, shape index: {0}]
  %s6 = inlined_call_operand.vmem [shape: f32[128,128], index: 6, kind: output, shape index: {1}]
  %7 = xla_tuple %s5, %s6
  %s8 = sld [smem:[#allocation0]]
  $region38: #{a_call__.9} parent=0
    _
  %s10 = ssub.s32 1, %s8
  %s11 = scalar_select 0, %s10, %s8
  // Predicated region
  $region2: #{a_call__.9} parent=0 // pred_check
    _
  $region3: #{a_call__.9} parent=0 // pred_check_branch
    %13 = sbr.rel (0) target = $region5
  $region4: #{a_call__.9} parent=0 // pred_region
    _
  $region5: #{a_call__.9} parent=0 // pred_fallthru
    _
  // Predicated region
  $region6: #{a_call__.9} parent=0 // pred_check
    _
  $region7: #{a_call__.9} parent=0 // pred_check_branch
    %15 = sbr.rel (0) target = $region9
  $region8: #{a_call__.9} parent=0 // pred_region
    _
  $region9: #{a_call__.9} parent=0 // pred_fallthru
    _
  // Predicated region
  $region10: #{a_call__.9} parent=0 // pred_check
    _
  $region11: #{a_call__.9} parent=0 // pred_check_branch
    %17 = sbr.rel (0) target = $region13
  $region12: #{a_call__.9} parent=0 // pred_region
    _
  $region13: #{a_call__.9} parent=0 // pred_fallthru
    _
  // Predicated region
  $region14: #{a_call__.9} parent=0 // pred_check
    _
  $region15: #{a_call__.9} parent=0 // pred_check_branch
    %19 = sbr.rel (0) target = $region17
  $region16: #{a_call__.9} parent=0 // pred_region
    _
  $region17: #{a_call__.9} parent=0 // pred_fallthru
    _
  // Predicated region
  $region18: #{a_call__.9} parent=0 // pred_check
    _
  $region19: #{a_call__.9} parent=0 // pred_check_branch
    %21 = sbr.rel (0) target = $region21
  $region20: #{a_call__.9} parent=0 // pred_region
    _
  $region21: #{a_call__.9} parent=0 // pred_fallthru
    _
  %v23 = vld [vmem:[%s0] sm:$0xf]
  %v24 = vld [vmem:[%s0 + $0x4] sm:$0xf]
  %v25 = vld [vmem:[%s0 + $0x8] sm:$0xf]
  %v26 = vld [vmem:[%s0 + $0xc] sm:$0xf]
  %v27 = vld [vmem:[%s0 + $0x10] sm:$0xf]
  %v28 = vld [vmem:[%s0 + $0x14] sm:$0xf]
  %v29 = vld [vmem:[%s0 + $0x18] sm:$0xf]
  %v30 = vld [vmem:[%s0 + $0x1c] sm:$0xf]
  %v31 = vld [vmem:[%s0 + $0x20] sm:$0xf]
  %v32 = vld [vmem:[%s0 + $0x24] sm:$0xf]
  %v33 = vld [vmem:[%s0 + $0x28] sm:$0xf]
  %v34 = vld [vmem:[%s0 + $0x2c] sm:$0xf]
  %v35 = vld [vmem:[%s0 + $0x30] sm:$0xf]
  %v36 = vld [vmem:[%s0 + $0x34] sm:$0xf]
  %v37 = vld [vmem:[%s0 + $0x38] sm:$0xf]
  %v38 = vld [vmem:[%s0 + $0x3c] sm:$0xf]
  %v39 = vld [vmem:[%s1] sm:$0xf]
  %v40 = vld [vmem:[%s1 + $0x4] sm:$0xf]
  %v41 = vld [vmem:[%s1 + $0x8] sm:$0xf]
  %v42 = vld [vmem:[%s1 + $0xc] sm:$0xf]
  %v43 = vld [vmem:[%s1 + $0x10] sm:$0xf]
  %v44 = vld [vmem:[%s1 + $0x14] sm:$0xf]
  %v45 = vld [vmem:[%s1 + $0x18] sm:$0xf]
  %v46 = vld [vmem:[%s1 + $0x1c] sm:$0xf]
  %v47 = vld [vmem:[%s1 + $0x20] sm:$0xf]
  %v48 = vld [vmem:[%s1 + $0x24] sm:$0xf]
  %v49 = vld [vmem:[%s1 + $0x28] sm:$0xf]
  %v50 = vld [vmem:[%s1 + $0x2c] sm:$0xf]
  %v51 = vld [vmem:[%s1 + $0x30] sm:$0xf]
  %v52 = vld [vmem:[%s1 + $0x34] sm:$0xf]
  %v53 = vld [vmem:[%s1 + $0x38] sm:$0xf]
  %v54 = vld [vmem:[%s1 + $0x3c] sm:$0xf]
  %v55 = vld [vmem:[%s2] sm:$0x1]
  %v57 = vlaneseq
  %v58 = vshrl.u32 %v57, 7
  %v59 = vsub.s32 0, %v58
  %v60 = vrot.slane %v55, %v59
  %v78 = vunpack.c.l.b16 %v23
  %v79 = vunpack.c.l.b16 %v24
  %v80 = vunpack.c.l.b16 %v25
  %v81 = vunpack.c.l.b16 %v26
  %v82 = vunpack.c.l.b16 %v27
  %v83 = vunpack.c.l.b16 %v28
  %v84 = vunpack.c.l.b16 %v29
  %v85 = vunpack.c.l.b16 %v30
  %v86 = vunpack.c.l.b16 %v31
  %v87 = vunpack.c.l.b16 %v32
  %v88 = vunpack.c.l.b16 %v33
  %v89 = vunpack.c.l.b16 %v34
  %v90 = vunpack.c.l.b16 %v35
  %v91 = vunpack.c.l.b16 %v36
  %v92 = vunpack.c.l.b16 %v37
  %v93 = vunpack.c.l.b16 %v38
  %v94 = vpack.c.b16 %v79, %v78
  %v95 = vpack.c.b16 %v81, %v80
  %v96 = vpack.c.b16 %v83, %v82
  %v97 = vpack.c.b16 %v85, %v84
  %v98 = vpack.c.b16 %v87, %v86
  %v99 = vpack.c.b16 %v89, %v88
  %v100 = vpack.c.b16 %v91, %v90
  %v101 = vpack.c.b16 %v93, %v92
  %v126 = vunpack.c.l.b16 %v39
  %v127 = vunpack.c.l.b16 %v40
  %v128 = vunpack.c.l.b16 %v41
  %v129 = vunpack.c.l.b16 %v42
  %v130 = vunpack.c.l.b16 %v43
  %v131 = vunpack.c.l.b16 %v44
  %v132 = vunpack.c.l.b16 %v45
  %v133 = vunpack.c.l.b16 %v46
  %v134 = vunpack.c.l.b16 %v47
  %v135 = vunpack.c.l.b16 %v48
  %v136 = vunpack.c.l.b16 %v49
  %v137 = vunpack.c.l.b16 %v50
  %v138 = vunpack.c.l.b16 %v51
  %v139 = vunpack.c.l.b16 %v52
  %v140 = vunpack.c.l.b16 %v53
  %v141 = vunpack.c.l.b16 %v54
  %v142 = vpack.c.b16 %v127, %v126
  %v143 = vpack.c.b16 %v129, %v128
  %v144 = vpack.c.b16 %v131, %v130
  %v145 = vpack.c.b16 %v133, %v132
  %v146 = vpack.c.b16 %v135, %v134
  %v147 = vpack.c.b16 %v137, %v136
  %v148 = vpack.c.b16 %v139, %v138
  %v149 = vpack.c.b16 %v141, %v140
  %158 = vmatprep.subr.bf16.mxu0 0
  %159 = vmatpush1.bf16.msra.mxu0 %v149
  %160 = vmatprep.subr.bf16.mxu0 0
  %161 = vmatpush1.bf16.msra.mxu0 %v148
  %162 = vmatprep.subr.bf16.mxu0 0
  %163 = vmatpush1.bf16.msra.mxu0 %v147
  %164 = vmatprep.subr.bf16.mxu0 0
  %165 = vmatpush1.bf16.msra.mxu0 %v146
  %166 = vmatprep.subr.bf16.mxu0 0
  %167 = vmatpush1.bf16.msra.mxu0 %v145
  %168 = vmatprep.subr.bf16.mxu0 0
  %169 = vmatpush1.bf16.msra.mxu0 %v144
  %170 = vmatprep.subr.bf16.mxu0 0
  %171 = vmatpush1.bf16.msra.mxu0 %v143
  %172 = vmatprep.subr.bf16.mxu0 0
  %173 = vmatpush1.bf16.msra.mxu0 %v142
  %174 = vmatprep.subr.bf16.mxu0 0
  %175 = vmatpush2.bf16.msra.mxu0 0
  %176 = vmatprep.subr.bf16.mxu0 0
  %177 = vmatpush2.bf16.msra.mxu0 0
  %178 = vmatprep.subr.bf16.mxu0 0
  %179 = vmatpush2.bf16.msra.mxu0 0
  %180 = vmatprep.subr.bf16.mxu0 0
  %181 = vmatpush2.bf16.msra.mxu0 0
  %182 = vmatprep.subr.bf16.mxu0 0
  %183 = vmatpush2.bf16.msra.mxu0 0
  %184 = vmatprep.subr.bf16.mxu0 0
  %185 = vmatpush2.bf16.msra.mxu0 0
  %186 = vmatprep.subr.bf16.mxu0 0
  %187 = vmatpush2.bf16.msra.mxu0 0
  %188 = vmatprep.subr.bf16.mxu0 0
  %189 = vmatpush2.bf16.msra.mxu0 0
  %190 = vmatprep.mubr.bf16.mxu0 0
  %191 = vmatmul.mubr.bf16.gmra.mxu0 %v94
  %v192 = vpop.f32.mrf.mxu0
  %v193 = vadd.f32 %v60, %v192
  %v194 = vpop.f32.mrf.mxu0
  %v195 = vpop.f32.mrf.mxu0
  %v196 = vadd.f32 %v60, %v195
  %v197 = vpop.f32.mrf.mxu0
  %198 = vmatprep.mubr.bf16.mxu0 0
  %199 = vmatmul.mubr.bf16.gmra.mxu0 %v95
  %v200 = vpop.f32.mrf.mxu0
  %v201 = vadd.f32 %v60, %v200
  %v202 = vpop.f32.mrf.mxu0
  %v203 = vpop.f32.mrf.mxu0
  %v204 = vadd.f32 %v60, %v203
  %v205 = vpop.f32.mrf.mxu0
  %206 = vmatprep.mubr.bf16.mxu0 0
  %207 = vmatmul.mubr.bf16.gmra.mxu0 %v96
  %v208 = vpop.f32.mrf.mxu0
  %v209 = vadd.f32 %v60, %v208
  %v210 = vpop.f32.mrf.mxu0
  %v211 = vpop.f32.mrf.mxu0
  %v212 = vadd.f32 %v60, %v211
  %v213 = vpop.f32.mrf.mxu0
  %214 = vmatprep.mubr.bf16.mxu0 0
  %215 = vmatmul.mubr.bf16.gmra.mxu0 %v97
  %v216 = vpop.f32.mrf.mxu0
  %v217 = vadd.f32 %v60, %v216
  %v218 = vpop.f32.mrf.mxu0
  %v219 = vpop.f32.mrf.mxu0
  %v220 = vadd.f32 %v60, %v219
  %v221 = vpop.f32.mrf.mxu0
  %222 = vmatprep.mubr.bf16.mxu0 0
  %223 = vmatmul.mubr.bf16.gmra.mxu0 %v98
  %v224 = vpop.f32.mrf.mxu0
  %v225 = vadd.f32 %v60, %v224
  %v226 = vpop.f32.mrf.mxu0
  %v227 = vpop.f32.mrf.mxu0
  %v228 = vadd.f32 %v60, %v227
  %v229 = vpop.f32.mrf.mxu0
  %230 = vmatprep.mubr.bf16.mxu0 0
  %231 = vmatmul.mubr.bf16.gmra.mxu0 %v99
  %v232 = vpop.f32.mrf.mxu0
  %v233 = vadd.f32 %v60, %v232
  %v234 = vpop.f32.mrf.mxu0
  %v235 = vpop.f32.mrf.mxu0
  %v236 = vadd.f32 %v60, %v235
  %v237 = vpop.f32.mrf.mxu0
  %238 = vmatprep.mubr.bf16.mxu0 0
  %239 = vmatmul.mubr.bf16.gmra.mxu0 %v100
  %v240 = vpop.f32.mrf.mxu0
  %v241 = vadd.f32 %v60, %v240
  %v242 = vpop.f32.mrf.mxu0
  %v243 = vpop.f32.mrf.mxu0
  %v244 = vadd.f32 %v60, %v243
  %v245 = vpop.f32.mrf.mxu0
  %246 = vmatprep.mubr.bf16.mxu0 0
  %247 = vmatmul.mubr.bf16.gmra.mxu0 %v101
  %v248 = vpop.f32.mrf.mxu0
  %v249 = vadd.f32 %v60, %v248
  %v250 = vpop.f32.mrf.mxu0
  %v251 = vpop.f32.mrf.mxu0
  %v252 = vadd.f32 %v60, %v251
  %v253 = vpop.f32.mrf.mxu0
  %254 = vdwg.mxu0
  %255 = vst [vmem:[%s5] sm:$0xff] %v193
  %256 = vst [vmem:[%s5 + $0x8] sm:$0xff] %v196
  %257 = vst [vmem:[%s5 + $0x10] sm:$0xff] %v201
  %258 = vst [vmem:[%s5 + $0x18] sm:$0xff] %v204
  %259 = vst [vmem:[%s5 + $0x20] sm:$0xff] %v209
  %260 = vst [vmem:[%s5 + $0x28] sm:$0xff] %v212
  %261 = vst [vmem:[%s5 + $0x30] sm:$0xff] %v217
  %262 = vst [vmem:[%s5 + $0x38] sm:$0xff] %v220
  %263 = vst [vmem:[%s5 + $0x40] sm:$0xff] %v225
  %264 = vst [vmem:[%s5 + $0x48] sm:$0xff] %v228
  %265 = vst [vmem:[%s5 + $0x50] sm:$0xff] %v233
  %266 = vst [vmem:[%s5 + $0x58] sm:$0xff] %v236
  %267 = vst [vmem:[%s5 + $0x60] sm:$0xff] %v241
  %268 = vst [vmem:[%s5 + $0x68] sm:$0xff] %v244
  %269 = vst [vmem:[%s5 + $0x70] sm:$0xff] %v249
  %270 = vst [vmem:[%s5 + $0x78] sm:$0xff] %v252
  %v271 = vxor.u32 %v193, 2147483648
  %v272 = vxor.u32 %v196, 2147483648
  %v273 = vxor.u32 %v201, 2147483648
  %v274 = vxor.u32 %v204, 2147483648
  %v275 = vxor.u32 %v209, 2147483648
  %v276 = vxor.u32 %v212, 2147483648
  %v277 = vxor.u32 %v217, 2147483648
  %v278 = vxor.u32 %v220, 2147483648
  %v279 = vxor.u32 %v225, 2147483648
  %v280 = vxor.u32 %v228, 2147483648
  %v281 = vxor.u32 %v233, 2147483648
  %v282 = vxor.u32 %v236, 2147483648
  %v283 = vxor.u32 %v241, 2147483648
  %v284 = vxor.u32 %v244, 2147483648
  %v285 = vxor.u32 %v249, 2147483648
  %v286 = vxor.u32 %v252, 2147483648
  %v287 = vmul.f32 %v271, 1.442695
  %v288 = vpow.pop %v287
  %v289 = vmul.f32 %v272, 1.442695
  %v290 = vpow.pop %v289
  %v291 = vmul.f32 %v273, 1.442695
  %v292 = vpow.pop %v291
  %v293 = vmul.f32 %v274, 1.442695
  %v294 = vpow.pop %v293
  %v295 = vmul.f32 %v275, 1.442695
  %v296 = vpow.pop %v295
  %v297 = vmul.f32 %v276, 1.442695
  %v298 = vpow.pop %v297
  %v299 = vmul.f32 %v277, 1.442695
  %v300 = vpow.pop %v299
  %v301 = vmul.f32 %v278, 1.442695
  %v302 = vpow.pop %v301
  %v303 = vmul.f32 %v279, 1.442695
  %v304 = vpow.pop %v303
  %v305 = vmul.f32 %v280, 1.442695
  %v306 = vpow.pop %v305
  %v307 = vmul.f32 %v281, 1.442695
  %v308 = vpow.pop %v307
  %v309 = vmul.f32 %v282, 1.442695
  %v310 = vpow.pop %v309
  %v311 = vmul.f32 %v283, 1.442695
  %v312 = vpow.pop %v311
  %v313 = vmul.f32 %v284, 1.442695
  %v314 = vpow.pop %v313
  %v315 = vmul.f32 %v285, 1.442695
  %v316 = vpow.pop %v315
  %v317 = vmul.f32 %v286, 1.442695
  %v318 = vpow.pop %v317
  %v319 = vadd.f32 %v288, 1.0
  %v320 = vadd.f32 %v290, 1.0
  %v321 = vadd.f32 %v292, 1.0
  %v322 = vadd.f32 %v294, 1.0
  %v323 = vadd.f32 %v296, 1.0
  %v324 = vadd.f32 %v298, 1.0
  %v325 = vadd.f32 %v300, 1.0
  %v326 = vadd.f32 %v302, 1.0
  %v327 = vadd.f32 %v304, 1.0
  %v328 = vadd.f32 %v306, 1.0
  %v329 = vadd.f32 %v308, 1.0
  %v330 = vadd.f32 %v310, 1.0
  %v331 = vadd.f32 %v312, 1.0
  %v332 = vadd.f32 %v314, 1.0
  %v333 = vadd.f32 %v316, 1.0
  %v334 = vadd.f32 %v318, 1.0
  %v335 = vrcp.pop %v319
  %v336 = vmul.f32 1.0, %v335
  %v337 = vrcp.pop %v320
  %v338 = vmul.f32 1.0, %v337
  %v339 = vrcp.pop %v321
  %v340 = vmul.f32 1.0, %v339
  %v341 = vrcp.pop %v322
  %v342 = vmul.f32 1.0, %v341
  %v343 = vrcp.pop %v323
  %v344 = vmul.f32 1.0, %v343
  %v345 = vrcp.pop %v324
  %v346 = vmul.f32 1.0, %v345
  %v347 = vrcp.pop %v325
  %v348 = vmul.f32 1.0, %v347
  %v349 = vrcp.pop %v326
  %v350 = vmul.f32 1.0, %v349
  %v351 = vrcp.pop %v327
  %v352 = vmul.f32 1.0, %v351
  %v353 = vrcp.pop %v328
  %v354 = vmul.f32 1.0, %v353
  %v355 = vrcp.pop %v329
  %v356 = vmul.f32 1.0, %v355
  %v357 = vrcp.pop %v330
  %v358 = vmul.f32 1.0, %v357
  %v359 = vrcp.pop %v331
  %v360 = vmul.f32 1.0, %v359
  %v361 = vrcp.pop %v332
  %v362 = vmul.f32 1.0, %v361
  %v363 = vrcp.pop %v333
  %v364 = vmul.f32 1.0, %v363
  %v365 = vrcp.pop %v334
  %v366 = vmul.f32 1.0, %v365
  %v367 = vld [vmem:[%s4] sm:$0x1]
  %v368 = vld [vmem:[%s4 + $0x1] sm:$0x1]
  %v369 = vld [vmem:[%s4 + $0x2] sm:$0x1]
  %v370 = vld [vmem:[%s4 + $0x3] sm:$0x1]
  %v371 = vld [vmem:[%s3] sm:$0xff]
  %v372 = vld [vmem:[%s3 + $0x8] sm:$0xff]
  %v373 = vld [vmem:[%s3 + $0x10] sm:$0xff]
  %v374 = vld [vmem:[%s3 + $0x18] sm:$0xff]
  %v375 = vld [vmem:[%s3 + $0x20] sm:$0xff]
  %v376 = vld [vmem:[%s3 + $0x28] sm:$0xff]
  %v377 = vld [vmem:[%s3 + $0x30] sm:$0xff]
  %v378 = vld [vmem:[%s3 + $0x38] sm:$0xff]
  %v379 = vld [vmem:[%s3 + $0x40] sm:$0xff]
  %v380 = vld [vmem:[%s3 + $0x48] sm:$0xff]
  %v381 = vld [vmem:[%s3 + $0x50] sm:$0xff]
  %v382 = vld [vmem:[%s3 + $0x58] sm:$0xff]
  %v383 = vld [vmem:[%s3 + $0x60] sm:$0xff]
  %v384 = vld [vmem:[%s3 + $0x68] sm:$0xff]
  %v385 = vld [vmem:[%s3 + $0x70] sm:$0xff]
  %v386 = vld [vmem:[%s3 + $0x78] sm:$0xff]
  %v387 = vlaneseq
  %v388 = vshrl.u32 %v387, 7
  %v389 = vsub.s32 0, %v388
  %v390 = vrot.slane %v367, %v389
  %392 = vset.pattern.permute.xlu0 0
  %393 = vperm.xlu0 %392, %v371
  %v394 = vpop.permute.xlu0 %393
  %397 = vset.pattern.permute.xlu0 0
  %398 = vperm.xlu0 %397, %v372
  %v399 = vpop.permute.xlu0 %398
  %402 = vset.pattern.permute.xlu0 0
  %403 = vperm.xlu0 %402, %v373
  %v404 = vpop.permute.xlu0 %403
  %407 = vset.pattern.permute.xlu0 0
  %408 = vperm.xlu0 %407, %v374
  %v409 = vpop.permute.xlu0 %408
  %412 = vset.pattern.permute.xlu0 0
  %413 = vperm.xlu0 %412, %v375
  %v414 = vpop.permute.xlu0 %413
  %417 = vset.pattern.permute.xlu0 0
  %418 = vperm.xlu0 %417, %v376
  %v419 = vpop.permute.xlu0 %418
  %422 = vset.pattern.permute.xlu0 0
  %423 = vperm.xlu0 %422, %v377
  %v424 = vpop.permute.xlu0 %423
  %427 = vset.pattern.permute.xlu0 0
  %428 = vperm.xlu0 %427, %v378
  %v429 = vpop.permute.xlu0 %428
  %432 = vset.pattern.permute.xlu0 0
  %433 = vperm.xlu0 %432, %v379
  %v434 = vpop.permute.xlu0 %433
  %437 = vset.pattern.permute.xlu0 0
  %438 = vperm.xlu0 %437, %v380
  %v439 = vpop.permute.xlu0 %438
  %442 = vset.pattern.permute.xlu0 0
  %443 = vperm.xlu0 %442, %v381
  %v444 = vpop.permute.xlu0 %443
  %447 = vset.pattern.permute.xlu0 0
  %448 = vperm.xlu0 %447, %v382
  %v449 = vpop.permute.xlu0 %448
  %452 = vset.pattern.permute.xlu0 0
  %453 = vperm.xlu0 %452, %v383
  %v454 = vpop.permute.xlu0 %453
  %457 = vset.pattern.permute.xlu0 0
  %458 = vperm.xlu0 %457, %v384
  %v459 = vpop.permute.xlu0 %458
  %462 = vset.pattern.permute.xlu0 0
  %463 = vperm.xlu0 %462, %v385
  %v464 = vpop.permute.xlu0 %463
  %467 = vset.pattern.permute.xlu0 0
  %468 = vperm.xlu0 %467, %v386
  %v469 = vpop.permute.xlu0 %468
  %v471 = vmul.f32 %v390, %v394
  %v472 = vmul.f32 %v390, %v399
  %v473 = vmul.f32 %v390, %v404
  %v474 = vmul.f32 %v390, %v409
  %v475 = vmul.f32 %v390, %v414
  %v476 = vmul.f32 %v390, %v419
  %v477 = vmul.f32 %v390, %v424
  %v478 = vmul.f32 %v390, %v429
  %v479 = vmul.f32 %v390, %v434
  %v480 = vmul.f32 %v390, %v439
  %v481 = vmul.f32 %v390, %v444
  %v482 = vmul.f32 %v390, %v449
  %v483 = vmul.f32 %v390, %v454
  %v484 = vmul.f32 %v390, %v459
  %v485 = vmul.f32 %v390, %v464
  %v486 = vmul.f32 %v390, %v469
  %v487 = vlaneseq
  %v488 = vshrl.u32 %v487, 7
  %v489 = vsub.s32 0, %v488
  %v490 = vrot.slane %v368, %v489
  %491 = vset.pattern.permute.xlu0 1
  %492 = vperm.xlu0 %491, %v371
  %v493 = vpop.permute.xlu0 %492
  %495 = vset.pattern.permute.xlu0 1
  %496 = vperm.xlu0 %495, %v372
  %v497 = vpop.permute.xlu0 %496
  %499 = vset.pattern.permute.xlu0 1
  %500 = vperm.xlu0 %499, %v373
  %v501 = vpop.permute.xlu0 %500
  %503 = vset.pattern.permute.xlu0 1
  %504 = vperm.xlu0 %503, %v374
  %v505 = vpop.permute.xlu0 %504
  %507 = vset.pattern.permute.xlu0 1
  %508 = vperm.xlu0 %507, %v375
  %v509 = vpop.permute.xlu0 %508
  %511 = vset.pattern.permute.xlu0 1
  %512 = vperm.xlu0 %511, %v376
  %v513 = vpop.permute.xlu0 %512
  %515 = vset.pattern.permute.xlu0 1
  %516 = vperm.xlu0 %515, %v377
  %v517 = vpop.permute.xlu0 %516
  %519 = vset.pattern.permute.xlu0 1
  %520 = vperm.xlu0 %519, %v378
  %v521 = vpop.permute.xlu0 %520
  %523 = vset.pattern.permute.xlu0 1
  %524 = vperm.xlu0 %523, %v379
  %v525 = vpop.permute.xlu0 %524
  %527 = vset.pattern.permute.xlu0 1
  %528 = vperm.xlu0 %527, %v380
  %v529 = vpop.permute.xlu0 %528
  %531 = vset.pattern.permute.xlu0 1
  %532 = vperm.xlu0 %531, %v381
  %v533 = vpop.permute.xlu0 %532
  %535 = vset.pattern.permute.xlu0 1
  %536 = vperm.xlu0 %535, %v382
  %v537 = vpop.permute.xlu0 %536
  %539 = vset.pattern.permute.xlu0 1
  %540 = vperm.xlu0 %539, %v383
  %v541 = vpop.permute.xlu0 %540
  %543 = vset.pattern.permute.xlu0 1
  %544 = vperm.xlu0 %543, %v384
  %v545 = vpop.permute.xlu0 %544
  %547 = vset.pattern.permute.xlu0 1
  %548 = vperm.xlu0 %547, %v385
  %v549 = vpop.permute.xlu0 %548
  %551 = vset.pattern.permute.xlu0 1
  %552 = vperm.xlu0 %551, %v386
  %v553 = vpop.permute.xlu0 %552
  %v555 = vmul.f32 %v490, %v493
  %v556 = vmul.f32 %v490, %v497
  %v557 = vmul.f32 %v490, %v501
  %v558 = vmul.f32 %v490, %v505
  %v559 = vmul.f32 %v490, %v509
  %v560 = vmul.f32 %v490, %v513
  %v561 = vmul.f32 %v490, %v517
  %v562 = vmul.f32 %v490, %v521
  %v563 = vmul.f32 %v490, %v525
  %v564 = vmul.f32 %v490, %v529
  %v565 = vmul.f32 %v490, %v533
  %v566 = vmul.f32 %v490, %v537
  %v567 = vmul.f32 %v490, %v541
  %v568 = vmul.f32 %v490, %v545
  %v569 = vmul.f32 %v490, %v549
  %v570 = vmul.f32 %v490, %v553
  %v571 = vadd.f32 %v471, %v555
  %v572 = vadd.f32 %v472, %v556
  %v573 = vadd.f32 %v473, %v557
  %v574 = vadd.f32 %v474, %v558
  %v575 = vadd.f32 %v475, %v559
  %v576 = vadd.f32 %v476, %v560
  %v577 = vadd.f32 %v477, %v561
  %v578 = vadd.f32 %v478, %v562
  %v579 = vadd.f32 %v479, %v563
  %v580 = vadd.f32 %v480, %v564
  %v581 = vadd.f32 %v481, %v565
  %v582 = vadd.f32 %v482, %v566
  %v583 = vadd.f32 %v483, %v567
  %v584 = vadd.f32 %v484, %v568
  %v585 = vadd.f32 %v485, %v569
  %v586 = vadd.f32 %v486, %v570
  %v587 = vadd.f32 %v367, %v368
  %v588 = vmul.f32 %v336, 2.0
  %v589 = vmul.f32 %v338, 2.0
  %v590 = vmul.f32 %v340, 2.0
  %v591 = vmul.f32 %v342, 2.0
  %v592 = vmul.f32 %v344, 2.0
  %v593 = vmul.f32 %v346, 2.0
  %v594 = vmul.f32 %v348, 2.0
  %v595 = vmul.f32 %v350, 2.0
  %v596 = vmul.f32 %v352, 2.0
  %v597 = vmul.f32 %v354, 2.0
  %v598 = vmul.f32 %v356, 2.0
  %v599 = vmul.f32 %v358, 2.0
  %v600 = vmul.f32 %v360, 2.0
  %v601 = vmul.f32 %v362, 2.0
  %v602 = vmul.f32 %v364, 2.0
  %v603 = vmul.f32 %v366, 2.0
  %v604 = vadd.f32 %v588, %v571
  %v605 = vadd.f32 %v589, %v572
  %v606 = vadd.f32 %v590, %v573
  %v607 = vadd.f32 %v591, %v574
  %v608 = vadd.f32 %v592, %v575
  %v609 = vadd.f32 %v593, %v576
  %v610 = vadd.f32 %v594, %v577
  %v611 = vadd.f32 %v595, %v578
  %v612 = vadd.f32 %v596, %v579
  %v613 = vadd.f32 %v597, %v580
  %v614 = vadd.f32 %v598, %v581
  %v615 = vadd.f32 %v599, %v582
  %v616 = vadd.f32 %v600, %v583
  %v617 = vadd.f32 %v601, %v584
  %v618 = vadd.f32 %v602, %v585
  %v619 = vadd.f32 %v603, %v586
  %v620 = vmul.f32 %v604, 8.0
  %v621 = vmul.f32 %v605, 8.0
  %v622 = vmul.f32 %v606, 8.0
  %v623 = vmul.f32 %v607, 8.0
  %v624 = vmul.f32 %v608, 8.0
  %v625 = vmul.f32 %v609, 8.0
  %v626 = vmul.f32 %v610, 8.0
  %v627 = vmul.f32 %v611, 8.0
  %v628 = vmul.f32 %v612, 8.0
  %v629 = vmul.f32 %v613, 8.0
  %v630 = vmul.f32 %v614, 8.0
  %v631 = vmul.f32 %v615, 8.0
  %v632 = vmul.f32 %v616, 8.0
  %v633 = vmul.f32 %v617, 8.0
  %v634 = vmul.f32 %v618, 8.0
  %v635 = vmul.f32 %v619, 8.0
  %v636 = vmul.f32 %v588, %v588
  %v637 = vmul.f32 %v589, %v589
  %v638 = vmul.f32 %v590, %v590
  %v639 = vmul.f32 %v591, %v591
  %v640 = vmul.f32 %v592, %v592
  %v641 = vmul.f32 %v593, %v593
  %v642 = vmul.f32 %v594, %v594
  %v643 = vmul.f32 %v595, %v595
  %v644 = vmul.f32 %v596, %v596
  %v645 = vmul.f32 %v597, %v597
  %v646 = vmul.f32 %v598, %v598
  %v647 = vmul.f32 %v599, %v599
  %v648 = vmul.f32 %v600, %v600
  %v649 = vmul.f32 %v601, %v601
  %v650 = vmul.f32 %v602, %v602
  %v651 = vmul.f32 %v603, %v603
  %v652 = vlaneseq
  %v653 = vshrl.u32 %v652, 7
  %v654 = vsub.s32 0, %v653
  %v655 = vrot.slane %v370, %v654
  %v656 = vmul.f32 %v636, %v655
  %v657 = vmul.f32 %v637, %v655
  %v658 = vmul.f32 %v638, %v655
  %v659 = vmul.f32 %v639, %v655
  %v660 = vmul.f32 %v640, %v655
  %v661 = vmul.f32 %v641, %v655
  %v662 = vmul.f32 %v642, %v655
  %v663 = vmul.f32 %v643, %v655
  %v664 = vmul.f32 %v644, %v655
  %v665 = vmul.f32 %v645, %v655
  %v666 = vmul.f32 %v646, %v655
  %v667 = vmul.f32 %v647, %v655
  %v668 = vmul.f32 %v648, %v655
  %v669 = vmul.f32 %v649, %v655
  %v670 = vmul.f32 %v650, %v655
  %v671 = vmul.f32 %v651, %v655
  %vm672 = vcmp.gt.f32.partialorder %v587, 0.0
  %vm673 = vcmp.gt.f32.partialorder %v369, 0.0
  %v674 = vsel %vm673, 1, 0
  %v675 = vlaneseq
  %v676 = vshrl.u32 %v675, 7
  %v677 = vsub.s32 0, %v676
  %v678 = vrot.slane %v674, %v677
  %vm679 = vcmp.eq.s32.totalorder %v678, 1
  %v680 = vsel %vm679, %v656, %v336
  %v681 = vsel %vm679, %v657, %v338
  %v682 = vsel %vm679, %v658, %v340
  %v683 = vsel %vm679, %v659, %v342
  %v684 = vsel %vm679, %v660, %v344
  %v685 = vsel %vm679, %v661, %v346
  %v686 = vsel %vm679, %v662, %v348
  %v687 = vsel %vm679, %v663, %v350
  %v688 = vsel %vm679, %v664, %v352
  %v689 = vsel %vm679, %v665, %v354
  %v690 = vsel %vm679, %v666, %v356
  %v691 = vsel %vm679, %v667, %v358
  %v692 = vsel %vm679, %v668, %v360
  %v693 = vsel %vm679, %v669, %v362
  %v694 = vsel %vm679, %v670, %v364
  %v695 = vsel %vm679, %v671, %v366
  %v696 = vsel %vm672, 1, 0
  %v697 = vlaneseq
  %v698 = vshrl.u32 %v697, 7
  %v699 = vsub.s32 0, %v698
  %v700 = vrot.slane %v696, %v699
  %vm701 = vcmp.eq.s32.totalorder %v700, 1
  %v702 = vsel %vm701, %v620, %v680
  %v703 = vsel %vm701, %v621, %v681
  %v704 = vsel %vm701, %v622, %v682
  %v705 = vsel %vm701, %v623, %v683
  %v706 = vsel %vm701, %v624, %v684
  %v707 = vsel %vm701, %v625, %v685
  %v708 = vsel %vm701, %v626, %v686
  %v709 = vsel %vm701, %v627, %v687
  %v710 = vsel %vm701, %v628, %v688
  %v711 = vsel %vm701, %v629, %v689
  %v712 = vsel %vm701, %v630, %v690
  %v713 = vsel %vm701, %v631, %v691
  %v714 = vsel %vm701, %v632, %v692
  %v715 = vsel %vm701, %v633, %v693
  %v716 = vsel %vm701, %v634, %v694
  %v717 = vsel %vm701, %v635, %v695
  %718 = vst [vmem:[%s6] sm:$0xff] %v702
  %719 = vst [vmem:[%s6 + $0x8] sm:$0xff] %v703
  %720 = vst [vmem:[%s6 + $0x10] sm:$0xff] %v704
  %721 = vst [vmem:[%s6 + $0x18] sm:$0xff] %v705
  %722 = vst [vmem:[%s6 + $0x20] sm:$0xff] %v706
  %723 = vst [vmem:[%s6 + $0x28] sm:$0xff] %v707
  %724 = vst [vmem:[%s6 + $0x30] sm:$0xff] %v708
  %725 = vst [vmem:[%s6 + $0x38] sm:$0xff] %v709
  %726 = vst [vmem:[%s6 + $0x40] sm:$0xff] %v710
  %727 = vst [vmem:[%s6 + $0x48] sm:$0xff] %v711
  %728 = vst [vmem:[%s6 + $0x50] sm:$0xff] %v712
  %729 = vst [vmem:[%s6 + $0x58] sm:$0xff] %v713
  %730 = vst [vmem:[%s6 + $0x60] sm:$0xff] %v714
  %731 = vst [vmem:[%s6 + $0x68] sm:$0xff] %v715
  %732 = vst [vmem:[%s6 + $0x70] sm:$0xff] %v716
  %733 = vst [vmem:[%s6 + $0x78] sm:$0xff] %v717
  // Predicated region
  $region22: #{a_call__.9} parent=0 // pred_check
    _
  $region23: #{a_call__.9} parent=0 // pred_check_branch
    %735 = sbr.rel (0) target = $region25
  $region24: #{a_call__.9} parent=0 // pred_region
    _
  $region25: #{a_call__.9} parent=0 // pred_fallthru
    _
  // Predicated region
  $region26: #{a_call__.9} parent=0 // pred_check
    _
  $region27: #{a_call__.9} parent=0 // pred_check_branch
    %737 = sbr.rel (0) target = $region29
  $region28: #{a_call__.9} parent=0 // pred_region
    _
  $region29: #{a_call__.9} parent=0 // pred_fallthru
    _
  // Predicated region
  $region30: #{a_call__.9} parent=0 // pred_check
    _
  $region31: #{a_call__.9} parent=0 // pred_check_branch
    %739 = sbr.rel (0) target = $region33
  $region32: #{a_call__.9} parent=0 // pred_region
    _
  $region33: #{a_call__.9} parent=0 // pred_fallthru
    _
  // Predicated region
  $region34: #{a_call__.9} parent=0 // pred_check
    _
  $region35: #{a_call__.9} parent=0 // pred_check_branch
    %741 = sbr.rel (0) target = $region37
  $region36: #{a_call__.9} parent=0 // pred_region
    _
  $region37: #{a_call__.9} parent=0 // pred_fallthru
    _

</llo_original>
